<compile_context>
chip_gen: v6e
topology: v6e:2x2x1
jax: 0.10.0
libtpu: 0.0.40
codegen_flags: <defaults>
</compile_context>

<pallas_src>
import functools
import math

import jax
import jax.numpy as jnp
from jax.experimental import pallas as pl
from jax.experimental.pallas import tpu as pltpu

# TODO(synk): config.use_cos comes from an external config object; fixed to True here.
USE_COS = True

LANE = 128       # last-dim tile (lanes)
SUBLANE = 8      # second-to-last tile (sublanes)
MXU_DTYPE = jnp.bfloat16   # MXU operand dtype (f32 accumulation kept)
GRU_T_CHUNK = 8  # timesteps per hoisted input-projection chunk (bounds live VMEM)


def _rup(x, m):
    return ((x + m - 1) // m) * m


def _pad2(a, rows, cols):
    return jnp.pad(a, ((0, rows - a.shape[0]), (0, cols - a.shape[1])))


def _mxu(a, b):
    """bf16-operand MXU matmul with f32 accumulation (used by kernels AND reference)."""
    return jnp.dot(a.astype(MXU_DTYPE), b.astype(MXU_DTYPE),
                   preferred_element_type=jnp.float32)


def _pinned(arr):
    """Full-array block pinned across the batch grid (weights stay VMEM-resident)."""
    zeros = (0,) * arr.ndim
    return pl.BlockSpec(arr.shape, lambda b, _z=zeros: _z)


# ---------------------------------------------------------------------------
# Kernel 1: single-layer GRU over the question embeddings (time-major input).
#   x_ref : [T, TB, E]   batch-tile of the embedded question (f32)
#   wx    : [E, 3H]      fused input-gate weights  (r | z | n), bf16
#   wh    : [H, 3H]      fused hidden-gate weights (r | z | n), bf16
#   bx    : [1, 3H]      f32, r/z hidden biases already folded in
#   bhn   : [1, H]       f32, n-gate hidden bias (must stay inside r*(...))
#   out   : [TB, H]      last hidden state (f32)
# ---------------------------------------------------------------------------
def _make_gru_kernel(T, H, chunk_t):
    def gru_kernel(x_ref, wx_ref, wh_ref, bx_ref, bhn_ref, h_out_ref):
        TB = x_ref.shape[1]
        E = x_ref.shape[2]
        wx = wx_ref[...]
        wh = wh_ref[...]
        bx = bx_ref[...]
        # Hoist the [1,H]->[TB,H] broadcast once (JAX does not CSE broadcast_in_dim).
        bhn = jnp.broadcast_to(bhn_ref[...], (TB, H))

        h = jnp.zeros((TB, H), jnp.float32)
        # Hoisted input projection, computed in T-chunks: one [tc*TB, E] @ [E, 3H]
        # MXU matmul per chunk (bounds live VMEM; no [T,B,3H] scratch), then the
        # recurrence only does h @ [H, 3H] per step.  T is static -> fully unrolled.
        for t0 in range(0, T, chunk_t):
            tc = min(chunk_t, T - t0)
            xc = x_ref[t0:t0 + tc].reshape(tc * TB, E)
            xp = (_mxu(xc, wx) + bx).reshape(tc, TB, 3 * H)
            for t in range(tc):
                xpt = xp[t]
                hp = _mxu(h, wh)
                r = jax.nn.sigmoid(xpt[:, :H] + hp[:, :H])
                z = jax.nn.sigmoid(xpt[:, H:2 * H] + hp[:, H:2 * H])
                n = jnp.tanh(xpt[:, 2 * H:] + r * (hp[:, 2 * H:] + bhn))
                h = (1.0 - z) * n + z * h
        h_out_ref[...] = h   # single store of the final hidden state

    return gru_kernel


def run_gru(x_tbe, pp, tb):
    T, Bp, Ep = x_tbe.shape
    Hp = pp["wh"].shape[0]
    kernel = _make_gru_kernel(T, Hp, chunk_t=min(T, GRU_T_CHUNK))
    return pl.pallas_call(
        kernel,
        out_shape=jax.ShapeDtypeStruct((Bp, Hp), jnp.float32),
        grid=(Bp // tb,),
        in_specs=[
            pl.BlockSpec((T, tb, Ep), lambda b: (0, b, 0)),
            _pinned(pp["wx"]),
            _pinned(pp["wh"]),
            _pinned(pp["bx"]),
            _pinned(pp["bhn"]),
        ],
        out_specs=pl.BlockSpec((tb, Hp), lambda b: (b, 0)),
        compiler_params=pltpu.CompilerParams(dimension_semantics=("parallel",)),
        # TODO(synk): set vmem_limit_bytes once E/H grow past the default scoped limit.
    )(x_tbe, pp["wx"], pp["wh"], pp["bx"], pp["bhn"])


# ---------------------------------------------------------------------------
# Kernel 2: fused VQA head — attention, pooling, q_net/v_net, fusion, classifier.
# Batch-tiled over B; all feature dims padded to multiples of 128, O padded to 128
# (padded object slots masked to -inf before the softmax).
# ---------------------------------------------------------------------------
def head_kernel(v_ref, q_ref,
                wva, bva, wqa, bqa, wa, ba,
                wqn, bqn, wvn, bvn, wf, bf, kmat_ref,
                logits_ref, joint_ref, *, num_objs):
    v = v_ref[...]                                   # [TB, Op, Dp] f32
    TB, Op, Dp = v.shape
    q = q_ref[...]                                   # [TB, Hp] f32
    Hp = q.shape[-1]

    # --- v_att(v, q_emb): FCNet(v) * FCNet(q) -> linear(H->1) -> softmax over O
    vp = jnp.maximum(_mxu(v.reshape(TB * Op, Dp), wva[...]) + bva[...], 0.0)
    vp3 = vp.reshape(TB, Op, Hp)
    qp = jnp.maximum(_mxu(q, wqa[...]) + bqa[...], 0.0)
    qpw = qp * wa[...]                               # fold the 1-unit linear into qp

    # Attention scores: VPU multiply + lane reduce over Hp (no M=1 MXU einsum,
    # no per-batch XLU transpose of vp).
    att_logits = jnp.sum(vp3 * qpw[:, None, :], axis=-1) + ba[...]       # [TB, Op]
    # Mask padded object slots (vp = relu(bva) != 0 there) before the softmax.
    obj_ids = jax.lax.broadcasted_iota(jnp.int32, (TB, Op), 1)
    att_logits = jnp.where(obj_ids < num_objs, att_logits, -1e30)
    m = jnp.max(att_logits, axis=-1, keepdims=True)
    e = jnp.exp(att_logits - m)
    att = e * pl.reciprocal(jnp.sum(e, axis=-1, keepdims=True), approx=True)

    # --- v_emb = (att * v).sum(1): VPU multiply + reduce over objects
    v_emb = jnp.sum(att[:, :, None] * v, axis=1)                         # [TB, Dp]

    # --- q_net / v_net (FCNet: linear + ReLU)
    q_repr = jnp.maximum(_mxu(q, wqn[...]) + bqn[...], 0.0)
    v_repr = jnp.maximum(_mxu(v_emb, wvn[...]) + bvn[...], 0.0)
    joint = q_repr * v_repr                                              # [TB, Hp]
    joint_ref[...] = joint

    # --- fusion (FCNet: H -> 2H)
    fus = jnp.maximum(_mxu(joint, wf[...]) + bf[...], 0.0)

    if USE_COS:
        # kmat columns are pre-normalized in the wrapper (weight-constant);
        # only the activation needs an in-kernel L2 norm (rsqrt -> EUP).
        fus = fus * jax.lax.rsqrt(
            jnp.sum(fus * fus, axis=-1, keepdims=True) + 1e-12)

    logits_ref[...] = _mxu(fus, kmat_ref[...])


def run_head(v_p, q_emb, pp, num_objs, tb):
    Bp, Op, Dp = v_p.shape
    Hp = q_emb.shape[-1]
    Cp = pp["kmat"].shape[-1]
    kernel = functools.partial(head_kernel, num_objs=num_objs)
    return pl.pallas_call(
        kernel,
        out_shape=(jax.ShapeDtypeStruct((Bp, Cp), jnp.float32),
                   jax.ShapeDtypeStruct((Bp, Hp), jnp.float32)),
        grid=(Bp // tb,),
        in_specs=[
            pl.BlockSpec((tb, Op, Dp), lambda b: (b, 0, 0)),
            pl.BlockSpec((tb, Hp), lambda b: (b, 0)),
            _pinned(pp["wva"]), _pinned(pp["bva"]),
            _pinned(pp["wqa"]), _pinned(pp["bqa"]),
            _pinned(pp["wa"]), _pinned(pp["ba"]),
            _pinned(pp["wqn"]), _pinned(pp["bqn"]),
            _pinned(pp["wvn"]), _pinned(pp["bvn"]),
            _pinned(pp["wf"]), _pinned(pp["bf"]),
            _pinned(pp["kmat"]),
        ],
        out_specs=(pl.BlockSpec((tb, Cp), lambda b: (b, 0)),
                   pl.BlockSpec((tb, Hp), lambda b: (b, 0))),
        compiler_params=pltpu.CompilerParams(dimension_semantics=("parallel",)),
        # TODO(synk): at production H/C, add a C-tiling grid axis for kmat (v7x 64 MiB VMEM)
        # and set vmem_limit_bytes explicitly.
    )(v_p, q_emb,
      pp["wva"], pp["bva"], pp["wqa"], pp["bqa"], pp["wa"], pp["ba"],
      pp["wqn"], pp["bqn"], pp["wvn"], pp["bvn"], pp["wf"], pp["bf"],
      pp["kmat"])


# ---------------------------------------------------------------------------
# One-time parameter prep: fuse GRU gate weights (and r/z hidden biases),
# zero-pad to (sublane, lane)-friendly shapes, cast MXU weights to bf16, and
# pre-normalize the cosine-classifier kernel.
# ---------------------------------------------------------------------------
def prepare_params(p):
    E = p["emb"].shape[1]
    H = p["whr"].shape[0]
    D = p["wva"].shape[0]
    C = p["kernel"].shape[1]
    F = 2 * H
    Ep, Hp, Dp, Fp, Cp = (_rup(x, LANE) for x in (E, H, D, F, C))

    pp = {"H": H, "C": C, "Hp": Hp, "Dp": Dp}
    pp["emb"] = jnp.pad(p["emb"], ((0, 0), (0, Ep - E)))

    # Fused GRU gates (r | z | n); each gate padded to Hp so the kernel slices
    # gates at 128-lane boundaries.  Zero padding keeps padded h columns at 0.
    pp["wx"] = jnp.concatenate(
        [_pad2(p[k], Ep, Hp) for k in ("wxr", "wxz", "wxn")], axis=1).astype(MXU_DTYPE)
    pp["wh"] = jnp.concatenate(
        [_pad2(p[k], Hp, Hp) for k in ("whr", "whz", "whn")], axis=1).astype(MXU_DTYPE)
    # r/z gates see xp + hp, so their hidden biases fold into the input biases;
    # only bhn must stay separate (it sits inside r * (...)).
    pp["bx"] = jnp.concatenate(
        [_pad2(p["bxr"] + p["bhr"], 1, Hp),
         _pad2(p["bxz"] + p["bhz"], 1, Hp),
         _pad2(p["bxn"], 1, Hp)], axis=1)
    pp["bhn"] = _pad2(p["bhn"], 1, Hp)

    pp["wva"], pp["bva"] = _pad2(p["wva"], Dp, Hp).astype(MXU_DTYPE), _pad2(p["bva"], 1, Hp)
    pp["wqa"], pp["bqa"] = _pad2(p["wqa"], Hp, Hp).astype(MXU_DTYPE), _pad2(p["bqa"], 1, Hp)
    pp["wa"], pp["ba"] = _pad2(p["wa"], 1, Hp), p["ba"]
    pp["wqn"], pp["bqn"] = _pad2(p["wqn"], Hp, Hp).astype(MXU_DTYPE), _pad2(p["bqn"], 1, Hp)
    pp["wvn"], pp["bvn"] = _pad2(p["wvn"], Dp, Hp).astype(MXU_DTYPE), _pad2(p["bvn"], 1, Hp)
    pp["wf"], pp["bf"] = _pad2(p["wf"], Hp, Fp).astype(MXU_DTYPE), _pad2(p["bf"], 1, Fp)

    kmat = p["kernel"]
    if USE_COS:
        # l2_norm(kernel, dim=0) is weight-constant: do it once here, not per call.
        kmat = kmat / jnp.linalg.norm(kmat, axis=0, keepdims=True)
    pp["kmat"] = _pad2(kmat, Fp, Cp).astype(MXU_DTYPE)
    return pp


# ---------------------------------------------------------------------------
# Full forward (embedding lookup is glue; rest is in the two Pallas kernels).
# ---------------------------------------------------------------------------
def forward(v, q, pp):
    B, O, D = v.shape
    Dp, H, C = pp["Dp"], pp["H"], pp["C"]
    tb = min(128, _rup(B, SUBLANE))       # batch tile (multiple of 8, capped at 128)
    Bp = _rup(B, tb)
    Op = _rup(O, LANE)                    # lane-dense attention logits / pooling

    # TODO(synk): the embedding gather stays as an XLA gather; a scalar-prefetch
    # pl.Element row-gather could fold it into the GRU kernel and skip the
    # [T,B,E] HBM round-trip at production shapes.
    q_p = jnp.pad(q, ((0, Bp - B), (0, 0)))
    # Gather directly in time-major order: no transposed [B,T,E] activation copy.
    x_tbe = jnp.take(pp["emb"], q_p.T, axis=0)             # [T, Bp, Ep] f32

    q_emb = run_gru(x_tbe, pp, tb)                          # [Bp, Hp]

    v_p = jnp.pad(v, ((0, Bp - B), (0, Op - O), (0, Dp - D)))   # [Bp, Op, Dp]
    logits_p, joint_p = run_head(v_p, q_emb, pp, num_objs=O, tb=tb)
    return logits_p[:B, :C], joint_p[:B, :H]


# ---------------------------------------------------------------------------
# Pure-JAX reference (same math, logical shapes, same bf16 MXU-operand casts)
# for a correctness check.
# ---------------------------------------------------------------------------
def forward_ref(v, q, p):
    x = jnp.take(p["emb"], q, axis=0)                       # [B, T, E]

    def step(h, xt):
        r = jax.nn.sigmoid(_mxu(xt, p["wxr"]) + p["bxr"] + p["bhr"] + _mxu(h, p["whr"]))
        z = jax.nn.sigmoid(_mxu(xt, p["wxz"]) + p["bxz"] + p["bhz"] + _mxu(h, p["whz"]))
        n = jnp.tanh(_mxu(xt, p["wxn"]) + p["bxn"] + r * (_mxu(h, p["whn"]) + p["bhn"]))
        return (1.0 - z) * n + z * h, None

    h0 = jnp.zeros((x.shape[0], p["whr"].shape[0]), jnp.float32)
    q_emb, _ = jax.lax.scan(step, h0, jnp.transpose(x, (1, 0, 2)))

    vp = jax.nn.relu(_mxu(v, p["wva"]) + p["bva"])
    qp = jax.nn.relu(_mxu(q_emb, p["wqa"]) + p["bqa"])
    att_logits = jnp.sum(vp * qp[:, None, :] * p["wa"][None], axis=-1) + p["ba"]
    att = jax.nn.softmax(att_logits, axis=-1)
    v_emb = jnp.sum(att[:, :, None] * v, axis=1)
    q_repr = jax.nn.relu(_mxu(q_emb, p["wqn"]) + p["bqn"])
    v_repr = jax.nn.relu(_mxu(v_emb, p["wvn"]) + p["bvn"])
    joint = q_repr * v_repr
    fus = jax.nn.relu(_mxu(joint, p["wf"]) + p["bf"])
    kmat = p["kernel"]
    if USE_COS:
        kmat = kmat / jnp.linalg.norm(kmat, axis=0, keepdims=True)
        fus = fus / jnp.linalg.norm(fus, axis=-1, keepdims=True)
    return _mxu(fus, kmat), joint


# ---------------------------------------------------------------------------
# Deterministic parameter init (shapes follow the module's __init__ contract).
# ---------------------------------------------------------------------------
def init_params(key, vocab, E, D, H, C):
    ks = iter(jax.random.split(key, 32))

    def u(k, shape, s):
        return jax.random.uniform(k, shape, jnp.float32, -s, s)

    p = {}
    p["emb"] = 0.1 * jax.random.normal(next(ks), (vocab, E), jnp.float32)
    sg = 1.0 / math.sqrt(H)
    for name, shape in [("wxr", (E, H)), ("wxz", (E, H)), ("wxn", (E, H)),
                        ("whr", (H, H)), ("whz", (H, H)), ("whn", (H, H)),
                        ("bxr", (1, H)), ("bxz", (1, H)), ("bxn", (1, H)),
                        ("bhr", (1, H)), ("bhz", (1, H)), ("bhn", (1, H))]:
        p[name] = u(next(ks), shape, sg)
    p["wva"], p["bva"] = u(next(ks), (D, H), 1 / math.sqrt(D)), u(next(ks), (1, H), 1 / math.sqrt(D))
    p["wqa"], p["bqa"] = u(next(ks), (H, H), sg), u(next(ks), (1, H), sg)
    p["wa"], p["ba"] = u(next(ks), (1, H), sg), u(next(ks), (1, 1), sg)
    p["wqn"], p["bqn"] = u(next(ks), (H, H), sg), u(next(ks), (1, H), sg)
    p["wvn"], p["bvn"] = u(next(ks), (D, H), 1 / math.sqrt(D)), u(next(ks), (1, H), 1 / math.sqrt(D))
    p["wf"], p["bf"] = u(next(ks), (H, 2 * H), sg), u(next(ks), (1, 2 * H), sg)
    # nn.Parameter(num_hid*2, num_class).uniform_(-1/num_hid2, 1/num_hid2)
    p["kernel"] = u(next(ks), (2 * H, C), 1.0 / (2 * H))
    return p


if __name__ == "__main__":
    B, T, O = 2, 8, 8
    VOCAB, E, D, H, C = 50, 32, 32, 32, 16

    key = jax.random.PRNGKey(0)
    kv, kq, kp = jax.random.split(key, 3)
    v = jax.random.normal(kv, (B, O, D), jnp.float32)       # [batch, num_objs, obj_dim]
    q = jax.random.randint(kq, (B, T), 0, VOCAB)             # [batch, seq_length]
    params = init_params(kp, VOCAB, E, D, H, C)
    padded = prepare_params(params)

    logits, joint = forward(v, q, padded)
    jax.block_until_ready((logits, joint))

    # Reference uses the same bf16 MXU-operand casts; tolerance covers the
    # approx reciprocal in the softmax and accumulation-order differences.
    ref_logits, ref_joint = forward_ref(v, q, params)
    assert logits.shape == (B, C) and joint.shape == (B, H)
    assert jnp.allclose(logits, ref_logits, atol=2e-2, rtol=2e-2), \
        float(jnp.max(jnp.abs(logits - ref_logits)))
    assert jnp.allclose(joint, ref_joint, atol=2e-2, rtol=2e-2), \
        float(jnp.max(jnp.abs(joint - ref_joint)))

    print("KERNEL_OK")
</pallas_src>

<mosaic_0001>
module attributes {stable_mosaic.version = 11 : i64} {
  func.func @gru_kernel(%arg0: i32, %arg1: memref<8x8x128xf32, #tpu.memory_space<vmem>>, %arg2: memref<128x384xbf16, #tpu.memory_space<vmem>>, %arg3: memref<128x384xbf16, #tpu.memory_space<vmem>>, %arg4: memref<1x384xf32, #tpu.memory_space<vmem>>, %arg5: memref<1x128xf32, #tpu.memory_space<vmem>>, %arg6: memref<8x128xf32, #tpu.memory_space<vmem>>) attributes {dimension_semantics = [#tpu.dimension_semantics<parallel>], iteration_bounds = array<i64: 1>, scalar_prefetch = 0 : i64, scratch_operands = 0 : i64, tpu.core_type = #tpu.core_type<tc>, window_params = [{transform_indices = @transform_0, window_bounds = array<i64: 8, 8, 128>}, {pipeline_mode = #tpu.pipeline_mode<synchronous>, transform_indices = @transform_1, window_bounds = array<i64: 128, 384>}, {pipeline_mode = #tpu.pipeline_mode<synchronous>, transform_indices = @transform_2, window_bounds = array<i64: 128, 384>}, {pipeline_mode = #tpu.pipeline_mode<synchronous>, transform_indices = @transform_3, window_bounds = array<i64: 1, 384>}, {pipeline_mode = #tpu.pipeline_mode<synchronous>, transform_indices = @transform_4, window_bounds = array<i64: 1, 128>}, {transform_indices = @transform_5, window_bounds = array<i64: 8, 128>}]} {
    %c0 = arith.constant 0 : index
    %c0_0 = arith.constant 0 : index
    %0 = vector.load %arg2[%c0, %c0_0] : memref<128x384xbf16, #tpu.memory_space<vmem>>, vector<128x384xbf16>
    %c0_1 = arith.constant 0 : index
    %c0_2 = arith.constant 0 : index
    %1 = vector.load %arg3[%c0_1, %c0_2] : memref<128x384xbf16, #tpu.memory_space<vmem>>, vector<128x384xbf16>
    %c0_3 = arith.constant 0 : index
    %c0_4 = arith.constant 0 : index
    %2 = vector.load %arg4[%c0_3, %c0_4] : memref<1x384xf32, #tpu.memory_space<vmem>>, vector<1x384xf32>
    %c0_5 = arith.constant 0 : index
    %c0_6 = arith.constant 0 : index
    %3 = vector.load %arg5[%c0_5, %c0_6] : memref<1x128xf32, #tpu.memory_space<vmem>>, vector<1x128xf32>
    %4 = vector.shape_cast %3 : vector<1x128xf32> to vector<1x128xf32>
    %5 = vector.broadcast %4 : vector<1x128xf32> to vector<8x128xf32>
    %cst = arith.constant 0.000000e+00 : f32
    %6 = vector.broadcast %cst : f32 to vector<8x128xf32>
    %c0_7 = arith.constant 0 : index
    %c0_8 = arith.constant 0 : index
    %c0_9 = arith.constant 0 : index
    %7 = vector.load %arg1[%c0_7, %c0_8, %c0_9] : memref<8x8x128xf32, #tpu.memory_space<vmem>>, vector<8x8x128xf32>
    %8 = vector.shape_cast %7 : vector<8x8x128xf32> to vector<64x128xf32>
    %9 = arith.truncf %8 : vector<64x128xf32> to vector<64x128xbf16>
    %cst_10 = arith.constant dense<0.000000e+00> : vector<64x384xf32>
    %10 = tpu.matmul %9, %0, %cst_10 {dimension_numbers = #tpu.dot_dimension_numbers<[1], [0], [0], [1], [0, 0, 1, 1], [], []>} : vector<64x128xbf16>, vector<128x384xbf16>, vector<64x384xf32> -> vector<64x384xf32>
    %11 = vector.broadcast %2 : vector<1x384xf32> to vector<64x384xf32>
    %12 = arith.addf %10, %11 : vector<64x384xf32>
    %13 = vector.shape_cast %12 : vector<64x384xf32> to vector<8x8x384xf32>
    %14 = vector.extract_strided_slice %13 {offsets = [0, 0, 0], sizes = [1, 8, 384], strides = [1, 1, 1]} : vector<8x8x384xf32> to vector<1x8x384xf32>
    %15 = vector.shape_cast %14 : vector<1x8x384xf32> to vector<8x384xf32>
    %16 = arith.truncf %6 : vector<8x128xf32> to vector<8x128xbf16>
    %cst_11 = arith.constant dense<0.000000e+00> : vector<8x384xf32>
    %17 = tpu.matmul %16, %1, %cst_11 {dimension_numbers = #tpu.dot_dimension_numbers<[1], [0], [0], [1], [0, 0, 1, 1], [], []>} : vector<8x128xbf16>, vector<128x384xbf16>, vector<8x384xf32> -> vector<8x384xf32>
    %18 = vector.extract_strided_slice %15 {offsets = [0, 0], sizes = [8, 128], strides = [1, 1]} : vector<8x384xf32> to vector<8x128xf32>
    %19 = vector.extract_strided_slice %17 {offsets = [0, 0], sizes = [8, 128], strides = [1, 1]} : vector<8x384xf32> to vector<8x128xf32>
    %20 = arith.addf %18, %19 : vector<8x128xf32>
    %21 = arith.negf %20 : vector<8x128xf32>
    %22 = math.exp %21 : vector<8x128xf32>
    %cst_12 = arith.constant 1.000000e+00 : f32
    %23 = vector.broadcast %cst_12 : f32 to vector<8x128xf32>
    %24 = arith.addf %23, %22 : vector<8x128xf32>
    %25 = arith.divf %23, %24 : vector<8x128xf32>
    %26 = vector.extract_strided_slice %15 {offsets = [0, 128], sizes = [8, 128], strides = [1, 1]} : vector<8x384xf32> to vector<8x128xf32>
    %27 = vector.extract_strided_slice %17 {offsets = [0, 128], sizes = [8, 128], strides = [1, 1]} : vector<8x384xf32> to vector<8x128xf32>
    %28 = arith.addf %26, %27 : vector<8x128xf32>
    %29 = arith.negf %28 : vector<8x128xf32>
    %30 = math.exp %29 : vector<8x128xf32>
    %cst_13 = arith.constant 1.000000e+00 : f32
    %31 = vector.broadcast %cst_13 : f32 to vector<8x128xf32>
    %32 = arith.addf %31, %30 : vector<8x128xf32>
    %33 = arith.divf %31, %32 : vector<8x128xf32>
    %34 = vector.extract_strided_slice %15 {offsets = [0, 256], sizes = [8, 128], strides = [1, 1]} : vector<8x384xf32> to vector<8x128xf32>
    %35 = vector.extract_strided_slice %17 {offsets = [0, 256], sizes = [8, 128], strides = [1, 1]} : vector<8x384xf32> to vector<8x128xf32>
    %36 = arith.addf %35, %5 : vector<8x128xf32>
    %37 = arith.mulf %25, %36 : vector<8x128xf32>
    %38 = arith.addf %34, %37 : vector<8x128xf32>
    %39 = math.tanh %38 : vector<8x128xf32>
    %cst_14 = arith.constant 1.000000e+00 : f32
    %40 = vector.broadcast %cst_14 : f32 to vector<8x128xf32>
    %41 = arith.subf %40, %33 : vector<8x128xf32>
    %42 = arith.mulf %41, %39 : vector<8x128xf32>
    %43 = arith.mulf %33, %6 : vector<8x128xf32>
    %44 = arith.addf %42, %43 : vector<8x128xf32>
    %45 = vector.extract_strided_slice %13 {offsets = [1, 0, 0], sizes = [1, 8, 384], strides = [1, 1, 1]} : vector<8x8x384xf32> to vector<1x8x384xf32>
    %46 = vector.shape_cast %45 : vector<1x8x384xf32> to vector<8x384xf32>
    %47 = arith.truncf %44 : vector<8x128xf32> to vector<8x128xbf16>
    %cst_15 = arith.constant dense<0.000000e+00> : vector<8x384xf32>
    %48 = tpu.matmul %47, %1, %cst_15 {dimension_numbers = #tpu.dot_dimension_numbers<[1], [0], [0], [1], [0, 0, 1, 1], [], []>} : vector<8x128xbf16>, vector<128x384xbf16>, vector<8x384xf32> -> vector<8x384xf32>
    %49 = vector.extract_strided_slice %46 {offsets = [0, 0], sizes = [8, 128], strides = [1, 1]} : vector<8x384xf32> to vector<8x128xf32>
    %50 = vector.extract_strided_slice %48 {offsets = [0, 0], sizes = [8, 128], strides = [1, 1]} : vector<8x384xf32> to vector<8x128xf32>
    %51 = arith.addf %49, %50 : vector<8x128xf32>
    %52 = arith.negf %51 : vector<8x128xf32>
    %53 = math.exp %52 : vector<8x128xf32>
    %cst_16 = arith.constant 1.000000e+00 : f32
    %54 = vector.broadcast %cst_16 : f32 to vector<8x128xf32>
    %55 = arith.addf %54, %53 : vector<8x128xf32>
    %56 = arith.divf %54, %55 : vector<8x128xf32>
    %57 = vector.extract_strided_slice %46 {offsets = [0, 128], sizes = [8, 128], strides = [1, 1]} : vector<8x384xf32> to vector<8x128xf32>
    %58 = vector.extract_strided_slice %48 {offsets = [0, 128], sizes = [8, 128], strides = [1, 1]} : vector<8x384xf32> to vector<8x128xf32>
    %59 = arith.addf %57, %58 : vector<8x128xf32>
    %60 = arith.negf %59 : vector<8x128xf32>
    %61 = math.exp %60 : vector<8x128xf32>
    %cst_17 = arith.constant 1.000000e+00 : f32
    %62 = vector.broadcast %cst_17 : f32 to vector<8x128xf32>
    %63 = arith.addf %62, %61 : vector<8x128xf32>
    %64 = arith.divf %62, %63 : vector<8x128xf32>
    %65 = vector.extract_strided_slice %46 {offsets = [0, 256], sizes = [8, 128], strides = [1, 1]} : vector<8x384xf32> to vector<8x128xf32>
    %66 = vector.extract_strided_slice %48 {offsets = [0, 256], sizes = [8, 128], strides = [1, 1]} : vector<8x384xf32> to vector<8x128xf32>
    %67 = arith.addf %66, %5 : vector<8x128xf32>
    %68 = arith.mulf %56, %67 : vector<8x128xf32>
    %69 = arith.addf %65, %68 : vector<8x128xf32>
    %70 = math.tanh %69 : vector<8x128xf32>
    %cst_18 = arith.constant 1.000000e+00 : f32
    %71 = vector.broadcast %cst_18 : f32 to vector<8x128xf32>
    %72 = arith.subf %71, %64 : vector<8x128xf32>
    %73 = arith.mulf %72, %70 : vector<8x128xf32>
    %74 = arith.mulf %64, %44 : vector<8x128xf32>
    %75 = arith.addf %73, %74 : vector<8x128xf32>
    %76 = vector.extract_strided_slice %13 {offsets = [2, 0, 0], sizes = [1, 8, 384], strides = [1, 1, 1]} : vector<8x8x384xf32> to vector<1x8x384xf32>
    %77 = vector.shape_cast %76 : vector<1x8x384xf32> to vector<8x384xf32>
    %78 = arith.truncf %75 : vector<8x128xf32> to vector<8x128xbf16>
    %cst_19 = arith.constant dense<0.000000e+00> : vector<8x384xf32>
    %79 = tpu.matmul %78, %1, %cst_19 {dimension_numbers = #tpu.dot_dimension_numbers<[1], [0], [0], [1], [0, 0, 1, 1], [], []>} : vector<8x128xbf16>, vector<128x384xbf16>, vector<8x384xf32> -> vector<8x384xf32>
    %80 = vector.extract_strided_slice %77 {offsets = [0, 0], sizes = [8, 128], strides = [1, 1]} : vector<8x384xf32> to vector<8x128xf32>
    %81 = vector.extract_strided_slice %79 {offsets = [0, 0], sizes = [8, 128], strides = [1, 1]} : vector<8x384xf32> to vector<8x128xf32>
    %82 = arith.addf %80, %81 : vector<8x128xf32>
    %83 = arith.negf %82 : vector<8x128xf32>
    %84 = math.exp %83 : vector<8x128xf32>
    %cst_20 = arith.constant 1.000000e+00 : f32
    %85 = vector.broadcast %cst_20 : f32 to vector<8x128xf32>
    %86 = arith.addf %85, %84 : vector<8x128xf32>
    %87 = arith.divf %85, %86 : vector<8x128xf32>
    %88 = vector.extract_strided_slice %77 {offsets = [0, 128], sizes = [8, 128], strides = [1, 1]} : vector<8x384xf32> to vector<8x128xf32>
    %89 = vector.extract_strided_slice %79 {offsets = [0, 128], sizes = [8, 128], strides = [1, 1]} : vector<8x384xf32> to vector<8x128xf32>
    %90 = arith.addf %88, %89 : vector<8x128xf32>
    %91 = arith.negf %90 : vector<8x128xf32>
    %92 = math.exp %91 : vector<8x128xf32>
    %cst_21 = arith.constant 1.000000e+00 : f32
    %93 = vector.broadcast %cst_21 : f32 to vector<8x128xf32>
    %94 = arith.addf %93, %92 : vector<8x128xf32>
    %95 = arith.divf %93, %94 : vector<8x128xf32>
    %96 = vector.extract_strided_slice %77 {offsets = [0, 256], sizes = [8, 128], strides = [1, 1]} : vector<8x384xf32> to vector<8x128xf32>
    %97 = vector.extract_strided_slice %79 {offsets = [0, 256], sizes = [8, 128], strides = [1, 1]} : vector<8x384xf32> to vector<8x128xf32>
    %98 = arith.addf %97, %5 : vector<8x128xf32>
    %99 = arith.mulf %87, %98 : vector<8x128xf32>
    %100 = arith.addf %96, %99 : vector<8x128xf32>
    %101 = math.tanh %100 : vector<8x128xf32>
    %cst_22 = arith.constant 1.000000e+00 : f32
    %102 = vector.broadcast %cst_22 : f32 to vector<8x128xf32>
    %103 = arith.subf %102, %95 : vector<8x128xf32>
    %104 = arith.mulf %103, %101 : vector<8x128xf32>
    %105 = arith.mulf %95, %75 : vector<8x128xf32>
    %106 = arith.addf %104, %105 : vector<8x128xf32>
    %107 = vector.extract_strided_slice %13 {offsets = [3, 0, 0], sizes = [1, 8, 384], strides = [1, 1, 1]} : vector<8x8x384xf32> to vector<1x8x384xf32>
    %108 = vector.shape_cast %107 : vector<1x8x384xf32> to vector<8x384xf32>
    %109 = arith.truncf %106 : vector<8x128xf32> to vector<8x128xbf16>
    %cst_23 = arith.constant dense<0.000000e+00> : vector<8x384xf32>
    %110 = tpu.matmul %109, %1, %cst_23 {dimension_numbers = #tpu.dot_dimension_numbers<[1], [0], [0], [1], [0, 0, 1, 1], [], []>} : vector<8x128xbf16>, vector<128x384xbf16>, vector<8x384xf32> -> vector<8x384xf32>
    %111 = vector.extract_strided_slice %108 {offsets = [0, 0], sizes = [8, 128], strides = [1, 1]} : vector<8x384xf32> to vector<8x128xf32>
    %112 = vector.extract_strided_slice %110 {offsets = [0, 0], sizes = [8, 128], strides = [1, 1]} : vector<8x384xf32> to vector<8x128xf32>
    %113 = arith.addf %111, %112 : vector<8x128xf32>
    %114 = arith.negf %113 : vector<8x128xf32>
    %115 = math.exp %114 : vector<8x128xf32>
    %cst_24 = arith.constant 1.000000e+00 : f32
    %116 = vector.broadcast %cst_24 : f32 to vector<8x128xf32>
    %117 = arith.addf %116, %115 : vector<8x128xf32>
    %118 = arith.divf %116, %117 : vector<8x128xf32>
    %119 = vector.extract_strided_slice %108 {offsets = [0, 128], sizes = [8, 128], strides = [1, 1]} : vector<8x384xf32> to vector<8x128xf32>
    %120 = vector.extract_strided_slice %110 {offsets = [0, 128], sizes = [8, 128], strides = [1, 1]} : vector<8x384xf32> to vector<8x128xf32>
    %121 = arith.addf %119, %120 : vector<8x128xf32>
    %122 = arith.negf %121 : vector<8x128xf32>
    %123 = math.exp %122 : vector<8x128xf32>
    %cst_25 = arith.constant 1.000000e+00 : f32
    %124 = vector.broadcast %cst_25 : f32 to vector<8x128xf32>
    %125 = arith.addf %124, %123 : vector<8x128xf32>
    %126 = arith.divf %124, %125 : vector<8x128xf32>
    %127 = vector.extract_strided_slice %108 {offsets = [0, 256], sizes = [8, 128], strides = [1, 1]} : vector<8x384xf32> to vector<8x128xf32>
    %128 = vector.extract_strided_slice %110 {offsets = [0, 256], sizes = [8, 128], strides = [1, 1]} : vector<8x384xf32> to vector<8x128xf32>
    %129 = arith.addf %128, %5 : vector<8x128xf32>
    %130 = arith.mulf %118, %129 : vector<8x128xf32>
    %131 = arith.addf %127, %130 : vector<8x128xf32>
    %132 = math.tanh %131 : vector<8x128xf32>
    %cst_26 = arith.constant 1.000000e+00 : f32
    %133 = vector.broadcast %cst_26 : f32 to vector<8x128xf32>
    %134 = arith.subf %133, %126 : vector<8x128xf32>
    %135 = arith.mulf %134, %132 : vector<8x128xf32>
    %136 = arith.mulf %126, %106 : vector<8x128xf32>
    %137 = arith.addf %135, %136 : vector<8x128xf32>
    %138 = vector.extract_strided_slice %13 {offsets = [4, 0, 0], sizes = [1, 8, 384], strides = [1, 1, 1]} : vector<8x8x384xf32> to vector<1x8x384xf32>
    %139 = vector.shape_cast %138 : vector<1x8x384xf32> to vector<8x384xf32>
    %140 = arith.truncf %137 : vector<8x128xf32> to vector<8x128xbf16>
    %cst_27 = arith.constant dense<0.000000e+00> : vector<8x384xf32>
    %141 = tpu.matmul %140, %1, %cst_27 {dimension_numbers = #tpu.dot_dimension_numbers<[1], [0], [0], [1], [0, 0, 1, 1], [], []>} : vector<8x128xbf16>, vector<128x384xbf16>, vector<8x384xf32> -> vector<8x384xf32>
    %142 = vector.extract_strided_slice %139 {offsets = [0, 0], sizes = [8, 128], strides = [1, 1]} : vector<8x384xf32> to vector<8x128xf32>
    %143 = vector.extract_strided_slice %141 {offsets = [0, 0], sizes = [8, 128], strides = [1, 1]} : vector<8x384xf32> to vector<8x128xf32>
    %144 = arith.addf %142, %143 : vector<8x128xf32>
    %145 = arith.negf %144 : vector<8x128xf32>
    %146 = math.exp %145 : vector<8x128xf32>
    %cst_28 = arith.constant 1.000000e+00 : f32
    %147 = vector.broadcast %cst_28 : f32 to vector<8x128xf32>
    %148 = arith.addf %147, %146 : vector<8x128xf32>
    %149 = arith.divf %147, %148 : vector<8x128xf32>
    %150 = vector.extract_strided_slice %139 {offsets = [0, 128], sizes = [8, 128], strides = [1, 1]} : vector<8x384xf32> to vector<8x128xf32>
    %151 = vector.extract_strided_slice %141 {offsets = [0, 128], sizes = [8, 128], strides = [1, 1]} : vector<8x384xf32> to vector<8x128xf32>
    %152 = arith.addf %150, %151 : vector<8x128xf32>
    %153 = arith.negf %152 : vector<8x128xf32>
    %154 = math.exp %153 : vector<8x128xf32>
    %cst_29 = arith.constant 1.000000e+00 : f32
    %155 = vector.broadcast %cst_29 : f32 to vector<8x128xf32>
    %156 = arith.addf %155, %154 : vector<8x128xf32>
    %157 = arith.divf %155, %156 : vector<8x128xf32>
    %158 = vector.extract_strided_slice %139 {offsets = [0, 256], sizes = [8, 128], strides = [1, 1]} : vector<8x384xf32> to vector<8x128xf32>
    %159 = vector.extract_strided_slice %141 {offsets = [0, 256], sizes = [8, 128], strides = [1, 1]} : vector<8x384xf32> to vector<8x128xf32>
    %160 = arith.addf %159, %5 : vector<8x128xf32>
    %161 = arith.mulf %149, %160 : vector<8x128xf32>
    %162 = arith.addf %158, %161 : vector<8x128xf32>
    %163 = math.tanh %162 : vector<8x128xf32>
    %cst_30 = arith.constant 1.000000e+00 : f32
    %164 = vector.broadcast %cst_30 : f32 to vector<8x128xf32>
    %165 = arith.subf %164, %157 : vector<8x128xf32>
    %166 = arith.mulf %165, %163 : vector<8x128xf32>
    %167 = arith.mulf %157, %137 : vector<8x128xf32>
    %168 = arith.addf %166, %167 : vector<8x128xf32>
    %169 = vector.extract_strided_slice %13 {offsets = [5, 0, 0], sizes = [1, 8, 384], strides = [1, 1, 1]} : vector<8x8x384xf32> to vector<1x8x384xf32>
    %170 = vector.shape_cast %169 : vector<1x8x384xf32> to vector<8x384xf32>
    %171 = arith.truncf %168 : vector<8x128xf32> to vector<8x128xbf16>
    %cst_31 = arith.constant dense<0.000000e+00> : vector<8x384xf32>
    %172 = tpu.matmul %171, %1, %cst_31 {dimension_numbers = #tpu.dot_dimension_numbers<[1], [0], [0], [1], [0, 0, 1, 1], [], []>} : vector<8x128xbf16>, vector<128x384xbf16>, vector<8x384xf32> -> vector<8x384xf32>
    %173 = vector.extract_strided_slice %170 {offsets = [0, 0], sizes = [8, 128], strides = [1, 1]} : vector<8x384xf32> to vector<8x128xf32>
    %174 = vector.extract_strided_slice %172 {offsets = [0, 0], sizes = [8, 128], strides = [1, 1]} : vector<8x384xf32> to vector<8x128xf32>
    %175 = arith.addf %173, %174 : vector<8x128xf32>
    %176 = arith.negf %175 : vector<8x128xf32>
    %177 = math.exp %176 : vector<8x128xf32>
    %cst_32 = arith.constant 1.000000e+00 : f32
    %178 = vector.broadcast %cst_32 : f32 to vector<8x128xf32>
    %179 = arith.addf %178, %177 : vector<8x128xf32>
    %180 = arith.divf %178, %179 : vector<8x128xf32>
    %181 = vector.extract_strided_slice %170 {offsets = [0, 128], sizes = [8, 128], strides = [1, 1]} : vector<8x384xf32> to vector<8x128xf32>
    %182 = vector.extract_strided_slice %172 {offsets = [0, 128], sizes = [8, 128], strides = [1, 1]} : vector<8x384xf32> to vector<8x128xf32>
    %183 = arith.addf %181, %182 : vector<8x128xf32>
    %184 = arith.negf %183 : vector<8x128xf32>
    %185 = math.exp %184 : vector<8x128xf32>
    %cst_33 = arith.constant 1.000000e+00 : f32
    %186 = vector.broadcast %cst_33 : f32 to vector<8x128xf32>
    %187 = arith.addf %186, %185 : vector<8x128xf32>
    %188 = arith.divf %186, %187 : vector<8x128xf32>
    %189 = vector.extract_strided_slice %170 {offsets = [0, 256], sizes = [8, 128], strides = [1, 1]} : vector<8x384xf32> to vector<8x128xf32>
    %190 = vector.extract_strided_slice %172 {offsets = [0, 256], sizes = [8, 128], strides = [1, 1]} : vector<8x384xf32> to vector<8x128xf32>
    %191 = arith.addf %190, %5 : vector<8x128xf32>
    %192 = arith.mulf %180, %191 : vector<8x128xf32>
    %193 = arith.addf %189, %192 : vector<8x128xf32>
    %194 = math.tanh %193 : vector<8x128xf32>
    %cst_34 = arith.constant 1.000000e+00 : f32
    %195 = vector.broadcast %cst_34 : f32 to vector<8x128xf32>
    %196 = arith.subf %195, %188 : vector<8x128xf32>
    %197 = arith.mulf %196, %194 : vector<8x128xf32>
    %198 = arith.mulf %188, %168 : vector<8x128xf32>
    %199 = arith.addf %197, %198 : vector<8x128xf32>
    %200 = vector.extract_strided_slice %13 {offsets = [6, 0, 0], sizes = [1, 8, 384], strides = [1, 1, 1]} : vector<8x8x384xf32> to vector<1x8x384xf32>
    %201 = vector.shape_cast %200 : vector<1x8x384xf32> to vector<8x384xf32>
    %202 = arith.truncf %199 : vector<8x128xf32> to vector<8x128xbf16>
    %cst_35 = arith.constant dense<0.000000e+00> : vector<8x384xf32>
    %203 = tpu.matmul %202, %1, %cst_35 {dimension_numbers = #tpu.dot_dimension_numbers<[1], [0], [0], [1], [0, 0, 1, 1], [], []>} : vector<8x128xbf16>, vector<128x384xbf16>, vector<8x384xf32> -> vector<8x384xf32>
    %204 = vector.extract_strided_slice %201 {offsets = [0, 0], sizes = [8, 128], strides = [1, 1]} : vector<8x384xf32> to vector<8x128xf32>
    %205 = vector.extract_strided_slice %203 {offsets = [0, 0], sizes = [8, 128], strides = [1, 1]} : vector<8x384xf32> to vector<8x128xf32>
    %206 = arith.addf %204, %205 : vector<8x128xf32>
    %207 = arith.negf %206 : vector<8x128xf32>
    %208 = math.exp %207 : vector<8x128xf32>
    %cst_36 = arith.constant 1.000000e+00 : f32
    %209 = vector.broadcast %cst_36 : f32 to vector<8x128xf32>
    %210 = arith.addf %209, %208 : vector<8x128xf32>
    %211 = arith.divf %209, %210 : vector<8x128xf32>
    %212 = vector.extract_strided_slice %201 {offsets = [0, 128], sizes = [8, 128], strides = [1, 1]} : vector<8x384xf32> to vector<8x128xf32>
    %213 = vector.extract_strided_slice %203 {offsets = [0, 128], sizes = [8, 128], strides = [1, 1]} : vector<8x384xf32> to vector<8x128xf32>
    %214 = arith.addf %212, %213 : vector<8x128xf32>
    %215 = arith.negf %214 : vector<8x128xf32>
    %216 = math.exp %215 : vector<8x128xf32>
    %cst_37 = arith.constant 1.000000e+00 : f32
    %217 = vector.broadcast %cst_37 : f32 to vector<8x128xf32>
    %218 = arith.addf %217, %216 : vector<8x128xf32>
    %219 = arith.divf %217, %218 : vector<8x128xf32>
    %220 = vector.extract_strided_slice %201 {offsets = [0, 256], sizes = [8, 128], strides = [1, 1]} : vector<8x384xf32> to vector<8x128xf32>
    %221 = vector.extract_strided_slice %203 {offsets = [0, 256], sizes = [8, 128], strides = [1, 1]} : vector<8x384xf32> to vector<8x128xf32>
    %222 = arith.addf %221, %5 : vector<8x128xf32>
    %223 = arith.mulf %211, %222 : vector<8x128xf32>
    %224 = arith.addf %220, %223 : vector<8x128xf32>
    %225 = math.tanh %224 : vector<8x128xf32>
    %cst_38 = arith.constant 1.000000e+00 : f32
    %226 = vector.broadcast %cst_38 : f32 to vector<8x128xf32>
    %227 = arith.subf %226, %219 : vector<8x128xf32>
    %228 = arith.mulf %227, %225 : vector<8x128xf32>
    %229 = arith.mulf %219, %199 : vector<8x128xf32>
    %230 = arith.addf %228, %229 : vector<8x128xf32>
    %231 = vector.extract_strided_slice %13 {offsets = [7, 0, 0], sizes = [1, 8, 384], strides = [1, 1, 1]} : vector<8x8x384xf32> to vector<1x8x384xf32>
    %232 = vector.shape_cast %231 : vector<1x8x384xf32> to vector<8x384xf32>
    %233 = arith.truncf %230 : vector<8x128xf32> to vector<8x128xbf16>
    %cst_39 = arith.constant dense<0.000000e+00> : vector<8x384xf32>
    %234 = tpu.matmul %233, %1, %cst_39 {dimension_numbers = #tpu.dot_dimension_numbers<[1], [0], [0], [1], [0, 0, 1, 1], [], []>} : vector<8x128xbf16>, vector<128x384xbf16>, vector<8x384xf32> -> vector<8x384xf32>
    %235 = vector.extract_strided_slice %232 {offsets = [0, 0], sizes = [8, 128], strides = [1, 1]} : vector<8x384xf32> to vector<8x128xf32>
    %236 = vector.extract_strided_slice %234 {offsets = [0, 0], sizes = [8, 128], strides = [1, 1]} : vector<8x384xf32> to vector<8x128xf32>
    %237 = arith.addf %235, %236 : vector<8x128xf32>
    %238 = arith.negf %237 : vector<8x128xf32>
    %239 = math.exp %238 : vector<8x128xf32>
    %cst_40 = arith.constant 1.000000e+00 : f32
    %240 = vector.broadcast %cst_40 : f32 to vector<8x128xf32>
    %241 = arith.addf %240, %239 : vector<8x128xf32>
    %242 = arith.divf %240, %241 : vector<8x128xf32>
    %243 = vector.extract_strided_slice %232 {offsets = [0, 128], sizes = [8, 128], strides = [1, 1]} : vector<8x384xf32> to vector<8x128xf32>
    %244 = vector.extract_strided_slice %234 {offsets = [0, 128], sizes = [8, 128], strides = [1, 1]} : vector<8x384xf32> to vector<8x128xf32>
    %245 = arith.addf %243, %244 : vector<8x128xf32>
    %246 = arith.negf %245 : vector<8x128xf32>
    %247 = math.exp %246 : vector<8x128xf32>
    %cst_41 = arith.constant 1.000000e+00 : f32
    %248 = vector.broadcast %cst_41 : f32 to vector<8x128xf32>
    %249 = arith.addf %248, %247 : vector<8x128xf32>
    %250 = arith.divf %248, %249 : vector<8x128xf32>
    %251 = vector.extract_strided_slice %232 {offsets = [0, 256], sizes = [8, 128], strides = [1, 1]} : vector<8x384xf32> to vector<8x128xf32>
    %252 = vector.extract_strided_slice %234 {offsets = [0, 256], sizes = [8, 128], strides = [1, 1]} : vector<8x384xf32> to vector<8x128xf32>
    %253 = arith.addf %252, %5 : vector<8x128xf32>
    %254 = arith.mulf %242, %253 : vector<8x128xf32>
    %255 = arith.addf %251, %254 : vector<8x128xf32>
    %256 = math.tanh %255 : vector<8x128xf32>
    %cst_42 = arith.constant 1.000000e+00 : f32
    %257 = vector.broadcast %cst_42 : f32 to vector<8x128xf32>
    %258 = arith.subf %257, %250 : vector<8x128xf32>
    %259 = arith.mulf %258, %256 : vector<8x128xf32>
    %260 = arith.mulf %250, %230 : vector<8x128xf32>
    %261 = arith.addf %259, %260 : vector<8x128xf32>
    %c0_43 = arith.constant 0 : index
    %c0_44 = arith.constant 0 : index
    %262 = vector.load %arg6[%c0_43, %c0_44] : memref<8x128xf32, #tpu.memory_space<vmem>>, vector<8x128xf32>
    tpu.vector_store %arg6[%c0_43, %c0_44], %261 {strides = array<i32>} : memref<8x128xf32, #tpu.memory_space<vmem>>, vector<8x128xf32>,
    return
  }
  func.func @transform_0(%arg0: i32) -> (i32, i32, i32) {
    %c0_i32 = arith.constant 0 : i32
    %c0_i32_0 = arith.constant 0 : i32
    %c0_i32_1 = arith.constant 0 : i32
    return %c0_i32, %arg0, %c0_i32_0 : i32, i32, i32
  }
  func.func @transform_1(%arg0: i32) -> (i32, i32) {
    %c0_i32 = arith.constant 0 : i32
    %c0_i32_0 = arith.constant 0 : i32
    %c0_i32_1 = arith.constant 0 : i32
    return %c0_i32, %c0_i32_0 : i32, i32
  }
  func.func @transform_2(%arg0: i32) -> (i32, i32) {
    %c0_i32 = arith.constant 0 : i32
    %c0_i32_0 = arith.constant 0 : i32
    %c0_i32_1 = arith.constant 0 : i32
    return %c0_i32, %c0_i32_0 : i32, i32
  }
  func.func @transform_3(%arg0: i32) -> (i32, i32) {
    %c0_i32 = arith.constant 0 : i32
    %c0_i32_0 = arith.constant 0 : i32
    %c0_i32_1 = arith.constant 0 : i32
    return %c0_i32, %c0_i32_0 : i32, i32
  }
  func.func @transform_4(%arg0: i32) -> (i32, i32) {
    %c0_i32 = arith.constant 0 : i32
    %c0_i32_0 = arith.constant 0 : i32
    %c0_i32_1 = arith.constant 0 : i32
    return %c0_i32, %c0_i32_0 : i32, i32
  }
  func.func @transform_5(%arg0: i32) -> (i32, i32) {
    %c0_i32 = arith.constant 0 : i32
    %c0_i32_0 = arith.constant 0 : i32
    return %arg0, %c0_i32 : i32, i32
  }
}

</mosaic_0001>

<llo_original>
// kernel: tpu_custom_call.1
$region0: #{tpu_custom_call.1}
  #allocation0 [shape = 'u32[]', space=smem, size = 0x4, offset = 0x4, fixed_abs, tag = 'smem constant byte address 0x4 - core index']
  #allocation1 [shape = 'u32[144,128]{1,0:T(1,128)}', space=vmem, size = 0x12000, scoped, tag = 'internal scratch']
  %s0 = inlined_call_operand.hbm [shape: f32[8,8,128], index: 0, kind: input, shape index: {}]
  %s1 = inlined_call_operand.hbm [shape: bf16[128,384], index: 1, kind: input, shape index: {}]
  %s2 = inlined_call_operand.hbm [shape: bf16[128,384], index: 2, kind: input, shape index: {}]
  %s3 = inlined_call_operand.vmem [shape: f32[1,384], index: 3, kind: input, shape index: {}]
  %s4 = inlined_call_operand.vmem [shape: f32[1,128], index: 4, kind: input, shape index: {}]
  %s5 = inlined_call_operand.hbm [shape: f32[8,128], index: 5, kind: output, shape index: {}]
  %s6 = sld [smem:[#allocation0]]
  $region42: #{tpu_custom_call.1} parent=0
    _
  %s8 = ssub.s32 1, %s6
  %s9 = scalar_select 0, %s8, %s6
  $region1: #{tpu_custom_call.1} parent=0
    #allocation2 [shape = 'u8[32768]{0}', space=vmem, size = 0x8000, scoped, tag = 'input window, operand 0, single buffered']
    #allocation3 [shape = 's32[1]{0}', space=sflag, size = 0x4, scoped, tag = 'scoped memory for tpu_custom_call.1']
    #allocation4 [shape = 's32[1]{0}', space=sflag, size = 0x4, scoped, tag = 'scoped memory for tpu_custom_call.1']
    #allocation5 [shape = 'u8[98304]{0}', space=vmem, size = 0x18000, scoped, tag = 'input window, operand 1, single buffered']
    #allocation6 [shape = 's32[1]{0}', space=sflag, size = 0x4, scoped, tag = 'scoped memory for tpu_custom_call.1']
    #allocation7 [shape = 'u8[98304]{0}', space=vmem, size = 0x18000, scoped, tag = 'input window, operand 2, single buffered']
    #allocation8 [shape = 'u8[4096]{0}', space=vmem, size = 0x1000, scoped, tag = 'output window, operand 0, single buffered']
    %10 = vsyncpa [#allocation3], 0
    %11 = vsyncpa [#allocation6], 0
    %12 = vsyncpa [#allocation4], 0
    // Predicated region
    $region2: #{tpu_custom_call.1} parent=1 // pred_check
      _
    $region3: #{tpu_custom_call.1} parent=1 // pred_check_branch
      %14 = sbr.rel (0) target = $region5
    $region4: #{tpu_custom_call.1} parent=1 // pred_region
      %s16 = ssub.s32 1024, 1024
      %17 = vsyncadd [#allocation3], %s16
      %s18 = sshll.u32 [#allocation2], 4
      %s19 = int_to_ptr.vmem [resolvable:$true] %s18
      %24 = dma.hbm_to_vmem [thread:$0]  %s0, 1024, %s19, [#allocation3], 128, 128, 8
    $region5: #{tpu_custom_call.1} parent=1 // pred_fallthru
      _
    // Predicated region
    $region6: #{tpu_custom_call.1} parent=1 // pred_check
      _
    $region7: #{tpu_custom_call.1} parent=1 // pred_check_branch
      %26 = sbr.rel (0) target = $region9
    $region8: #{tpu_custom_call.1} parent=1 // pred_region
      %s28 = ssub.s32 3072, 3072
      %29 = vsyncadd [#allocation6], %s28
      %s30 = sshll.u32 [#allocation5], 4
      %s31 = int_to_ptr.vmem [resolvable:$true] %s30
      %36 = dma.hbm_to_vmem [thread:$0]  %s1, 3072, %s31, [#allocation6], 192, 192, 12
    $region9: #{tpu_custom_call.1} parent=1 // pred_fallthru
      _
    // Predicated region
    $region10: #{tpu_custom_call.1} parent=1 // pred_check
      _
    $region11: #{tpu_custom_call.1} parent=1 // pred_check_branch
      %38 = sbr.rel (0) target = $region13
    $region12: #{tpu_custom_call.1} parent=1 // pred_region
      %s40 = ssub.s32 3072, 3072
      %41 = vsyncadd [#allocation6], %s40
      %s42 = sshll.u32 [#allocation7], 4
      %s43 = int_to_ptr.vmem [resolvable:$true] %s42
      %48 = dma.hbm_to_vmem [thread:$0]  %s2, 3072, %s43, [#allocation6], 192, 192, 12
    $region13: #{tpu_custom_call.1} parent=1 // pred_fallthru
      _
    // Predicated region
    $region14: #{tpu_custom_call.1} parent=1 // pred_check
      _
    $region15: #{tpu_custom_call.1} parent=1 // pred_check_branch
      %50 = sbr.rel (0) target = $region17
    $region16: #{tpu_custom_call.1} parent=1 // pred_region
      _
    $region17: #{tpu_custom_call.1} parent=1 // pred_fallthru
      _
    // Predicated region
    $region18: #{tpu_custom_call.1} parent=1 // pred_check
      _
    $region19: #{tpu_custom_call.1} parent=1 // pred_check_branch
      %52 = sbr.rel (0) target = $region21
    $region20: #{tpu_custom_call.1} parent=1 // pred_region
      _
    $region21: #{tpu_custom_call.1} parent=1 // pred_fallthru
      _
    // Predicated region
    $region22: #{tpu_custom_call.1} parent=1 // pred_check
      _
    $region23: #{tpu_custom_call.1} parent=1 // pred_check_branch
      %54 = sbr.rel (0) target = $region25
    $region24: #{tpu_custom_call.1} parent=1 // pred_region
      %55 = dma.done [#allocation3], 1024
    $region25: #{tpu_custom_call.1} parent=1 // pred_fallthru
      _
    // Predicated region
    $region26: #{tpu_custom_call.1} parent=1 // pred_check
      _
    $region27: #{tpu_custom_call.1} parent=1 // pred_check_branch
      %57 = sbr.rel (0) target = $region29
    $region28: #{tpu_custom_call.1} parent=1 // pred_region
      %58 = dma.done [#allocation6], 3072
    $region29: #{tpu_custom_call.1} parent=1 // pred_fallthru
      _
    // Predicated region
    $region30: #{tpu_custom_call.1} parent=1 // pred_check
      _
    $region31: #{tpu_custom_call.1} parent=1 // pred_check_branch
      %60 = sbr.rel (0) target = $region33
    $region32: #{tpu_custom_call.1} parent=1 // pred_region
      %61 = dma.done [#allocation6], 3072
    $region33: #{tpu_custom_call.1} parent=1 // pred_fallthru
      _
    %v63 = vld [vmem:[#allocation5] sm:$0xff]
    %v64 = vld [vmem:[#allocation5 + $0x8] sm:$0xf]
    %v65 = vld [vmem:[#allocation5 + $0xc] sm:$0xff]
    %v66 = vld [vmem:[#allocation5 + $0x14] sm:$0xf]
    %v67 = vld [vmem:[#allocation5 + $0x18] sm:$0xff]
    %v68 = vld [vmem:[#allocation5 + $0x20] sm:$0xf]
    %v69 = vld [vmem:[#allocation5 + $0x24] sm:$0xff]
    %v70 = vld [vmem:[#allocation5 + $0x2c] sm:$0xf]
    %v71 = vld [vmem:[#allocation5 + $0x30] sm:$0xff]
    %v72 = vld [vmem:[#allocation5 + $0x38] sm:$0xf]
    %v73 = vld [vmem:[#allocation5 + $0x3c] sm:$0xff]
    %v74 = vld [vmem:[#allocation5 + $0x44] sm:$0xf]
    %v75 = vld [vmem:[#allocation5 + $0x48] sm:$0xff]
    %v76 = vld [vmem:[#allocation5 + $0x50] sm:$0xf]
    %v77 = vld [vmem:[#allocation5 + $0x54] sm:$0xff]
    %v78 = vld [vmem:[#allocation5 + $0x5c] sm:$0xf]
    %v79 = vld [vmem:[#allocation5 + $0x60] sm:$0xff]
    %v80 = vld [vmem:[#allocation5 + $0x68] sm:$0xf]
    %v81 = vld [vmem:[#allocation5 + $0x6c] sm:$0xff]
    %v82 = vld [vmem:[#allocation5 + $0x74] sm:$0xf]
    %v83 = vld [vmem:[#allocation5 + $0x78] sm:$0xff]
    %v84 = vld [vmem:[#allocation5 + $0x80] sm:$0xf]
    %v85 = vld [vmem:[#allocation5 + $0x84] sm:$0xff]
    %v86 = vld [vmem:[#allocation5 + $0x8c] sm:$0xf]
    %v87 = vld [vmem:[#allocation5 + $0x90] sm:$0xff]
    %v88 = vld [vmem:[#allocation5 + $0x98] sm:$0xf]
    %v89 = vld [vmem:[#allocation5 + $0x9c] sm:$0xff]
    %v90 = vld [vmem:[#allocation5 + $0xa4] sm:$0xf]
    %v91 = vld [vmem:[#allocation5 + $0xa8] sm:$0xff]
    %v92 = vld [vmem:[#allocation5 + $0xb0] sm:$0xf]
    %v93 = vld [vmem:[#allocation5 + $0xb4] sm:$0xff]
    %v94 = vld [vmem:[#allocation5 + $0xbc] sm:$0xf]
    %v95 = vld [vmem:[#allocation7] sm:$0xff]
    %v96 = vld [vmem:[#allocation7 + $0x8] sm:$0xf]
    %v97 = vld [vmem:[#allocation7 + $0xc] sm:$0xff]
    %v98 = vld [vmem:[#allocation7 + $0x14] sm:$0xf]
    %v99 = vld [vmem:[#allocation7 + $0x18] sm:$0xff]
    %v100 = vld [vmem:[#allocation7 + $0x20] sm:$0xf]
    %v101 = vld [vmem:[#allocation7 + $0x24] sm:$0xff]
    %v102 = vld [vmem:[#allocation7 + $0x2c] sm:$0xf]
    %v103 = vld [vmem:[#allocation7 + $0x30] sm:$0xff]
    %v104 = vld [vmem:[#allocation7 + $0x38] sm:$0xf]
    %v105 = vld [vmem:[#allocation7 + $0x3c] sm:$0xff]
    %v106 = vld [vmem:[#allocation7 + $0x44] sm:$0xf]
    %v107 = vld [vmem:[#allocation7 + $0x48] sm:$0xff]
    %v108 = vld [vmem:[#allocation7 + $0x50] sm:$0xf]
    %v109 = vld [vmem:[#allocation7 + $0x54] sm:$0xff]
    %v110 = vld [vmem:[#allocation7 + $0x5c] sm:$0xf]
    %v111 = vld [vmem:[#allocation7 + $0x60] sm:$0xff]
    %v112 = vld [vmem:[#allocation7 + $0x68] sm:$0xf]
    %v113 = vld [vmem:[#allocation7 + $0x6c] sm:$0xff]
    %v114 = vld [vmem:[#allocation7 + $0x74] sm:$0xf]
    %v115 = vld [vmem:[#allocation7 + $0x78] sm:$0xff]
    %v116 = vld [vmem:[#allocation7 + $0x80] sm:$0xf]
    %v117 = vld [vmem:[#allocation7 + $0x84] sm:$0xff]
    %v118 = vld [vmem:[#allocation7 + $0x8c] sm:$0xf]
    %v119 = vld [vmem:[#allocation7 + $0x90] sm:$0xff]
    %v120 = vld [vmem:[#allocation7 + $0x98] sm:$0xf]
    %v121 = vld [vmem:[#allocation7 + $0x9c] sm:$0xff]
    %v122 = vld [vmem:[#allocation7 + $0xa4] sm:$0xf]
    %v123 = vld [vmem:[#allocation7 + $0xa8] sm:$0xff]
    %v124 = vld [vmem:[#allocation7 + $0xb0] sm:$0xf]
    %v125 = vld [vmem:[#allocation7 + $0xb4] sm:$0xff]
    %v126 = vld [vmem:[#allocation7 + $0xbc] sm:$0xf]
    %v127 = vld [vmem:[%s3] sm:$0x7]
    %v128 = vld [vmem:[%s4] sm:$0x1]
    %v130 = vlaneseq
    %v131 = vshrl.u32 %v130, 7
    %v132 = vsub.s32 0, %v131
    %v133 = vrot.slane %v128, %v132
    %v135 = vld [vmem:[#allocation2] sm:$0xff]
    %v136 = vld [vmem:[#allocation2 + $0x8] sm:$0xff]
    %v137 = vld [vmem:[#allocation2 + $0x10] sm:$0xff]
    %v138 = vld [vmem:[#allocation2 + $0x18] sm:$0xff]
    %v139 = vld [vmem:[#allocation2 + $0x20] sm:$0xff]
    %v140 = vld [vmem:[#allocation2 + $0x28] sm:$0xff]
    %v141 = vld [vmem:[#allocation2 + $0x30] sm:$0xff]
    %v142 = vld [vmem:[#allocation2 + $0x38] sm:$0xff]
    %v143 = vpack.c.bf16 %v136, %v135
    %v144 = vpack.c.bf16 %v138, %v137
    %v145 = vpack.c.bf16 %v140, %v139
    %v146 = vpack.c.bf16 %v142, %v141
    %v148 = vlaneseq
    %v149 = vshrl.u32 %v148, 7
    %v150 = vsub.s32 0, %v149
    %v151 = vrot.slane %v127, %v150
    %v152 = vlaneseq
    %v153 = vshrl.u32 %v152, 7
    %v154 = vsub.s32 1, %v153
    %v155 = vrot.slane %v127, %v154
    %v156 = vlaneseq
    %v157 = vshrl.u32 %v156, 7
    %v158 = vsub.s32 2, %v157
    %v159 = vrot.slane %v127, %v158
    %v195 = vunpack.c.l.b16 %v63
    %v196 = vunpack.c.h.b16 %v63
    %v197 = vunpack.c.l.b16 %v64
    %v198 = vunpack.c.l.b16 %v65
    %v199 = vunpack.c.h.b16 %v65
    %v200 = vunpack.c.l.b16 %v66
    %v201 = vunpack.c.l.b16 %v67
    %v202 = vunpack.c.h.b16 %v67
    %v203 = vunpack.c.l.b16 %v68
    %v204 = vunpack.c.l.b16 %v69
    %v205 = vunpack.c.h.b16 %v69
    %v206 = vunpack.c.l.b16 %v70
    %v207 = vunpack.c.l.b16 %v71
    %v208 = vunpack.c.h.b16 %v71
    %v209 = vunpack.c.l.b16 %v72
    %v210 = vunpack.c.l.b16 %v73
    %v211 = vunpack.c.h.b16 %v73
    %v212 = vunpack.c.l.b16 %v74
    %v213 = vunpack.c.l.b16 %v75
    %v214 = vunpack.c.h.b16 %v75
    %v215 = vunpack.c.l.b16 %v76
    %v216 = vunpack.c.l.b16 %v77
    %v217 = vunpack.c.h.b16 %v77
    %v218 = vunpack.c.l.b16 %v78
    %v219 = vunpack.c.l.b16 %v79
    %v220 = vunpack.c.h.b16 %v79
    %v221 = vunpack.c.l.b16 %v80
    %v222 = vunpack.c.l.b16 %v81
    %v223 = vunpack.c.h.b16 %v81
    %v224 = vunpack.c.l.b16 %v82
    %v225 = vunpack.c.l.b16 %v83
    %v226 = vunpack.c.h.b16 %v83
    %v227 = vunpack.c.l.b16 %v84
    %v228 = vunpack.c.l.b16 %v85
    %v229 = vunpack.c.h.b16 %v85
    %v230 = vunpack.c.l.b16 %v86
    %v231 = vunpack.c.l.b16 %v87
    %v232 = vunpack.c.h.b16 %v87
    %v233 = vunpack.c.l.b16 %v88
    %v234 = vunpack.c.l.b16 %v89
    %v235 = vunpack.c.h.b16 %v89
    %v236 = vunpack.c.l.b16 %v90
    %v237 = vunpack.c.l.b16 %v91
    %v238 = vunpack.c.h.b16 %v91
    %v239 = vunpack.c.l.b16 %v92
    %v240 = vunpack.c.l.b16 %v93
    %v241 = vunpack.c.h.b16 %v93
    %v242 = vunpack.c.l.b16 %v94
    %v243 = vpack.c.b16 %v198, %v195
    %v244 = vpack.c.b16 %v199, %v196
    %v245 = vpack.c.b16 %v200, %v197
    %v246 = vpack.c.b16 %v204, %v201
    %v247 = vpack.c.b16 %v205, %v202
    %v248 = vpack.c.b16 %v206, %v203
    %v249 = vpack.c.b16 %v210, %v207
    %v250 = vpack.c.b16 %v211, %v208
    %v251 = vpack.c.b16 %v212, %v209
    %v252 = vpack.c.b16 %v216, %v213
    %v253 = vpack.c.b16 %v217, %v214
    %v254 = vpack.c.b16 %v218, %v215
    %v255 = vpack.c.b16 %v222, %v219
    %v256 = vpack.c.b16 %v223, %v220
    %v257 = vpack.c.b16 %v224, %v221
    %v258 = vpack.c.b16 %v228, %v225
    %v259 = vpack.c.b16 %v229, %v226
    %v260 = vpack.c.b16 %v230, %v227
    %v261 = vpack.c.b16 %v234, %v231
    %v262 = vpack.c.b16 %v235, %v232
    %v263 = vpack.c.b16 %v236, %v233
    %v264 = vpack.c.b16 %v240, %v237
    %v265 = vpack.c.b16 %v241, %v238
    %v266 = vpack.c.b16 %v242, %v239
    %291 = vmatprep.subr.bf16.mxu0 %v265
    %292 = vmatpush1.bf16.msra.mxu0 %v264
    %293 = vmatprep.subr.bf16.mxu0 %v262
    %294 = vmatpush1.bf16.msra.mxu0 %v261
    %295 = vmatprep.subr.bf16.mxu0 %v259
    %296 = vmatpush1.bf16.msra.mxu0 %v258
    %297 = vmatprep.subr.bf16.mxu0 %v256
    %298 = vmatpush1.bf16.msra.mxu0 %v255
    %299 = vmatprep.subr.bf16.mxu0 %v253
    %300 = vmatpush1.bf16.msra.mxu0 %v252
    %301 = vmatprep.subr.bf16.mxu0 %v250
    %302 = vmatpush1.bf16.msra.mxu0 %v249
    %303 = vmatprep.subr.bf16.mxu0 %v247
    %304 = vmatpush1.bf16.msra.mxu0 %v246
    %305 = vmatprep.subr.bf16.mxu0 %v244
    %306 = vmatpush1.bf16.msra.mxu0 %v243
    %307 = vmatprep.subr.bf16.mxu0 0
    %308 = vmatpush2.bf16.msra.mxu0 0
    %309 = vmatprep.subr.bf16.mxu0 0
    %310 = vmatpush2.bf16.msra.mxu0 0
    %311 = vmatprep.subr.bf16.mxu0 0
    %312 = vmatpush2.bf16.msra.mxu0 0
    %313 = vmatprep.subr.bf16.mxu0 0
    %314 = vmatpush2.bf16.msra.mxu0 0
    %315 = vmatprep.subr.bf16.mxu0 0
    %316 = vmatpush2.bf16.msra.mxu0 0
    %317 = vmatprep.subr.bf16.mxu0 0
    %318 = vmatpush2.bf16.msra.mxu0 0
    %319 = vmatprep.subr.bf16.mxu0 0
    %320 = vmatpush2.bf16.msra.mxu0 0
    %321 = vmatprep.subr.bf16.mxu0 0
    %322 = vmatpush2.bf16.msra.mxu0 0
    %323 = vmatprep.mubr.bf16.mxu0 0
    %324 = vmatmul.mubr.bf16.gmra.mxu0 %v143
    %v325 = vpop.f32.mrf.mxu0
    %v326 = vadd.f32 %v151, %v325
    %v327 = vpop.f32.mrf.mxu0
    %v328 = vadd.f32 %v155, %v327
    %v329 = vpop.f32.mrf.mxu0
    %v330 = vadd.f32 %v151, %v329
    %v331 = vpop.f32.mrf.mxu0
    %v332 = vadd.f32 %v155, %v331
    %333 = vmatprep.mubr.bf16.mxu0 0
    %334 = vmatmul.mubr.bf16.gmra.mxu0 %v144
    %v335 = vpop.f32.mrf.mxu0
    %v336 = vadd.f32 %v151, %v335
    %v337 = vpop.f32.mrf.mxu0
    %v338 = vadd.f32 %v155, %v337
    %v339 = vpop.f32.mrf.mxu0
    %v340 = vadd.f32 %v151, %v339
    %v341 = vpop.f32.mrf.mxu0
    %v342 = vadd.f32 %v155, %v341
    %343 = vmatprep.mubr.bf16.mxu0 0
    %344 = vmatmul.mubr.bf16.gmra.mxu0 %v145
    %v345 = vpop.f32.mrf.mxu0
    %v346 = vadd.f32 %v151, %v345
    %v347 = vpop.f32.mrf.mxu0
    %v348 = vadd.f32 %v155, %v347
    %v349 = vpop.f32.mrf.mxu0
    %v350 = vadd.f32 %v151, %v349
    %v351 = vpop.f32.mrf.mxu0
    %v352 = vadd.f32 %v155, %v351
    %353 = vmatprep.mubr.bf16.mxu0 0
    %354 = vmatmul.mubr.bf16.gmra.mxu0 %v146
    %v355 = vpop.f32.mrf.mxu0
    %v356 = vadd.f32 %v151, %v355
    %v357 = vpop.f32.mrf.mxu0
    %v358 = vadd.f32 %v155, %v357
    %v359 = vpop.f32.mrf.mxu0
    %v360 = vadd.f32 %v151, %v359
    %v361 = vpop.f32.mrf.mxu0
    %v362 = vadd.f32 %v155, %v361
    %363 = vdwg.mxu0
    %364 = vmatprep.subr.bf16.mxu0 0
    %365 = vmatpush1.bf16.msra.mxu0 %v266
    %366 = vmatprep.subr.bf16.mxu0 0
    %367 = vmatpush1.bf16.msra.mxu0 %v263
    %368 = vmatprep.subr.bf16.mxu0 0
    %369 = vmatpush1.bf16.msra.mxu0 %v260
    %370 = vmatprep.subr.bf16.mxu0 0
    %371 = vmatpush1.bf16.msra.mxu0 %v257
    %372 = vmatprep.subr.bf16.mxu0 0
    %373 = vmatpush1.bf16.msra.mxu0 %v254
    %374 = vmatprep.subr.bf16.mxu0 0
    %375 = vmatpush1.bf16.msra.mxu0 %v251
    %376 = vmatprep.subr.bf16.mxu0 0
    %377 = vmatpush1.bf16.msra.mxu0 %v248
    %378 = vmatprep.subr.bf16.mxu0 0
    %379 = vmatpush1.bf16.msra.mxu0 %v245
    %380 = vmatprep.subr.bf16.mxu0 0
    %381 = vmatpush2.bf16.msra.mxu0 0
    %382 = vmatprep.subr.bf16.mxu0 0
    %383 = vmatpush2.bf16.msra.mxu0 0
    %384 = vmatprep.subr.bf16.mxu0 0
    %385 = vmatpush2.bf16.msra.mxu0 0
    %386 = vmatprep.subr.bf16.mxu0 0
    %387 = vmatpush2.bf16.msra.mxu0 0
    %388 = vmatprep.subr.bf16.mxu0 0
    %389 = vmatpush2.bf16.msra.mxu0 0
    %390 = vmatprep.subr.bf16.mxu0 0
    %391 = vmatpush2.bf16.msra.mxu0 0
    %392 = vmatprep.subr.bf16.mxu0 0
    %393 = vmatpush2.bf16.msra.mxu0 0
    %394 = vmatprep.subr.bf16.mxu0 0
    %395 = vmatpush2.bf16.msra.mxu0 0
    %396 = vmatprep.mubr.bf16.mxu0 0
    %397 = vmatmul.mubr.bf16.gmra.mxu0 %v143
    %v398 = vpop.f32.mrf.mxu0
    %v399 = vadd.f32 %v159, %v398
    %v400 = vpop.f32.mrf.mxu0
    %v401 = vpop.f32.mrf.mxu0
    %v402 = vadd.f32 %v159, %v401
    %v403 = vpop.f32.mrf.mxu0
    %404 = vmatprep.mubr.bf16.mxu0 0
    %405 = vmatmul.mubr.bf16.gmra.mxu0 %v144
    %v406 = vpop.f32.mrf.mxu0
    %v407 = vadd.f32 %v159, %v406
    %v408 = vpop.f32.mrf.mxu0
    %v409 = vpop.f32.mrf.mxu0
    %v410 = vadd.f32 %v159, %v409
    %v411 = vpop.f32.mrf.mxu0
    %412 = vmatprep.mubr.bf16.mxu0 0
    %413 = vmatmul.mubr.bf16.gmra.mxu0 %v145
    %v414 = vpop.f32.mrf.mxu0
    %v415 = vadd.f32 %v159, %v414
    %v416 = vpop.f32.mrf.mxu0
    %v417 = vpop.f32.mrf.mxu0
    %v418 = vadd.f32 %v159, %v417
    %v419 = vpop.f32.mrf.mxu0
    %420 = vmatprep.mubr.bf16.mxu0 0
    %421 = vmatmul.mubr.bf16.gmra.mxu0 %v146
    %v422 = vpop.f32.mrf.mxu0
    %v423 = vadd.f32 %v159, %v422
    %v424 = vpop.f32.mrf.mxu0
    %v425 = vpop.f32.mrf.mxu0
    %v426 = vadd.f32 %v159, %v425
    %v427 = vpop.f32.mrf.mxu0
    %428 = vdwg.mxu0
    %v461 = vunpack.c.l.b16 %v95
    %v462 = vunpack.c.h.b16 %v95
    %v463 = vunpack.c.l.b16 %v96
    %v464 = vunpack.c.l.b16 %v97
    %v465 = vunpack.c.h.b16 %v97
    %v466 = vunpack.c.l.b16 %v98
    %v467 = vunpack.c.l.b16 %v99
    %v468 = vunpack.c.h.b16 %v99
    %v469 = vunpack.c.l.b16 %v100
    %v470 = vunpack.c.l.b16 %v101
    %v471 = vunpack.c.h.b16 %v101
    %v472 = vunpack.c.l.b16 %v102
    %v473 = vunpack.c.l.b16 %v103
    %v474 = vunpack.c.h.b16 %v103
    %v475 = vunpack.c.l.b16 %v104
    %v476 = vunpack.c.l.b16 %v105
    %v477 = vunpack.c.h.b16 %v105
    %v478 = vunpack.c.l.b16 %v106
    %v479 = vunpack.c.l.b16 %v107
    %v480 = vunpack.c.h.b16 %v107
    %v481 = vunpack.c.l.b16 %v108
    %v482 = vunpack.c.l.b16 %v109
    %v483 = vunpack.c.h.b16 %v109
    %v484 = vunpack.c.l.b16 %v110
    %v485 = vunpack.c.l.b16 %v111
    %v486 = vunpack.c.h.b16 %v111
    %v487 = vunpack.c.l.b16 %v112
    %v488 = vunpack.c.l.b16 %v113
    %v489 = vunpack.c.h.b16 %v113
    %v490 = vunpack.c.l.b16 %v114
    %v491 = vunpack.c.l.b16 %v115
    %v492 = vunpack.c.h.b16 %v115
    %v493 = vunpack.c.l.b16 %v116
    %v494 = vunpack.c.l.b16 %v117
    %v495 = vunpack.c.h.b16 %v117
    %v496 = vunpack.c.l.b16 %v118
    %v497 = vunpack.c.l.b16 %v119
    %v498 = vunpack.c.h.b16 %v119
    %v499 = vunpack.c.l.b16 %v120
    %v500 = vunpack.c.l.b16 %v121
    %v501 = vunpack.c.h.b16 %v121
    %v502 = vunpack.c.l.b16 %v122
    %v503 = vunpack.c.l.b16 %v123
    %v504 = vunpack.c.h.b16 %v123
    %v505 = vunpack.c.l.b16 %v124
    %v506 = vunpack.c.l.b16 %v125
    %v507 = vunpack.c.h.b16 %v125
    %v508 = vunpack.c.l.b16 %v126
    %v509 = vpack.c.b16 %v464, %v461
    %v510 = vpack.c.b16 %v465, %v462
    %v511 = vpack.c.b16 %v466, %v463
    %v512 = vpack.c.b16 %v470, %v467
    %v513 = vpack.c.b16 %v471, %v468
    %v514 = vpack.c.b16 %v472, %v469
    %v515 = vpack.c.b16 %v476, %v473
    %v516 = vpack.c.b16 %v477, %v474
    %v517 = vpack.c.b16 %v478, %v475
    %v518 = vpack.c.b16 %v482, %v479
    %v519 = vpack.c.b16 %v483, %v480
    %v520 = vpack.c.b16 %v484, %v481
    %v521 = vpack.c.b16 %v488, %v485
    %v522 = vpack.c.b16 %v489, %v486
    %v523 = vpack.c.b16 %v490, %v487
    %v524 = vpack.c.b16 %v494, %v491
    %v525 = vpack.c.b16 %v495, %v492
    %v526 = vpack.c.b16 %v496, %v493
    %v527 = vpack.c.b16 %v500, %v497
    %v528 = vpack.c.b16 %v501, %v498
    %v529 = vpack.c.b16 %v502, %v499
    %v530 = vpack.c.b16 %v506, %v503
    %v531 = vpack.c.b16 %v507, %v504
    %v532 = vpack.c.b16 %v508, %v505
    %557 = vmatprep.subr.bf16.mxu0 %v531
    %558 = vmatpush1.bf16.msra.mxu0 %v530
    %559 = vmatprep.subr.bf16.mxu0 %v528
    %560 = vmatpush1.bf16.msra.mxu0 %v527
    %561 = vmatprep.subr.bf16.mxu0 %v525
    %562 = vmatpush1.bf16.msra.mxu0 %v524
    %563 = vmatprep.subr.bf16.mxu0 %v522
    %564 = vmatpush1.bf16.msra.mxu0 %v521
    %565 = vmatprep.subr.bf16.mxu0 %v519
    %566 = vmatpush1.bf16.msra.mxu0 %v518
    %567 = vmatprep.subr.bf16.mxu0 %v516
    %568 = vmatpush1.bf16.msra.mxu0 %v515
    %569 = vmatprep.subr.bf16.mxu0 %v513
    %570 = vmatpush1.bf16.msra.mxu0 %v512
    %571 = vmatprep.subr.bf16.mxu0 %v510
    %572 = vmatpush1.bf16.msra.mxu0 %v509
    %573 = vmatprep.subr.bf16.mxu0 0
    %574 = vmatpush2.bf16.msra.mxu0 0
    %575 = vmatprep.subr.bf16.mxu0 0
    %576 = vmatpush2.bf16.msra.mxu0 0
    %577 = vmatprep.subr.bf16.mxu0 0
    %578 = vmatpush2.bf16.msra.mxu0 0
    %579 = vmatprep.subr.bf16.mxu0 0
    %580 = vmatpush2.bf16.msra.mxu0 0
    %581 = vmatprep.subr.bf16.mxu0 0
    %582 = vmatpush2.bf16.msra.mxu0 0
    %583 = vmatprep.subr.bf16.mxu0 0
    %584 = vmatpush2.bf16.msra.mxu0 0
    %585 = vmatprep.subr.bf16.mxu0 0
    %586 = vmatpush2.bf16.msra.mxu0 0
    %587 = vmatprep.subr.bf16.mxu0 0
    %588 = vmatpush2.bf16.msra.mxu0 0
    %589 = vmatprep.mubr.bf16.mxu0 0
    %590 = vmatmul.mubr.bf16.gmra.mxu0 0
    %v591 = vpop.f32.mrf.mxu0
    %v592 = vadd.f32 0.0, %v591
    %v593 = vpop.f32.mrf.mxu0
    %v594 = vadd.f32 0.0, %v593
    %v595 = vpop.f32.mrf.mxu0
    %v596 = vpop.f32.mrf.mxu0
    %597 = vdwg.mxu0
    %598 = vmatprep.subr.bf16.mxu0 0
    %599 = vmatpush1.bf16.msra.mxu0 %v532
    %600 = vmatprep.subr.bf16.mxu0 0
    %601 = vmatpush1.bf16.msra.mxu0 %v529
    %602 = vmatprep.subr.bf16.mxu0 0
    %603 = vmatpush1.bf16.msra.mxu0 %v526
    %604 = vmatprep.subr.bf16.mxu0 0
    %605 = vmatpush1.bf16.msra.mxu0 %v523
    %606 = vmatprep.subr.bf16.mxu0 0
    %607 = vmatpush1.bf16.msra.mxu0 %v520
    %608 = vmatprep.subr.bf16.mxu0 0
    %609 = vmatpush1.bf16.msra.mxu0 %v517
    %610 = vmatprep.subr.bf16.mxu0 0
    %611 = vmatpush1.bf16.msra.mxu0 %v514
    %612 = vmatprep.subr.bf16.mxu0 0
    %613 = vmatpush1.bf16.msra.mxu0 %v511
    %614 = vmatprep.subr.bf16.mxu0 0
    %615 = vmatpush2.bf16.msra.mxu0 0
    %616 = vmatprep.subr.bf16.mxu0 0
    %617 = vmatpush2.bf16.msra.mxu0 0
    %618 = vmatprep.subr.bf16.mxu0 0
    %619 = vmatpush2.bf16.msra.mxu0 0
    %620 = vmatprep.subr.bf16.mxu0 0
    %621 = vmatpush2.bf16.msra.mxu0 0
    %622 = vmatprep.subr.bf16.mxu0 0
    %623 = vmatpush2.bf16.msra.mxu0 0
    %624 = vmatprep.subr.bf16.mxu0 0
    %625 = vmatpush2.bf16.msra.mxu0 0
    %626 = vmatprep.subr.bf16.mxu0 0
    %627 = vmatpush2.bf16.msra.mxu0 0
    %628 = vmatprep.subr.bf16.mxu0 0
    %629 = vmatpush2.bf16.msra.mxu0 0
    %630 = vmatprep.mubr.bf16.mxu0 0
    %631 = vmatmul.mubr.bf16.gmra.mxu0 0
    %v632 = vpop.f32.mrf.mxu0
    %v633 = vadd.f32 0.0, %v632
    %v634 = vpop.f32.mrf.mxu0
    %v635 = vpop.f32.mrf.mxu0
    %v636 = vpop.f32.mrf.mxu0
    %637 = vdwg.mxu0
    %v638 = vadd.f32 %v326, %v592
    %v639 = vxor.u32 %v638, 2147483648
    %v640 = vmul.f32 %v639, 1.442695
    %v641 = vpow.pop %v640
    %v642 = vadd.f32 %v641, 1.0
    %v643 = vrcp.pop %v642
    %v644 = vmul.f32 1.0, %v643
    %v645 = vadd.f32 %v328, %v594
    %v646 = vxor.u32 %v645, 2147483648
    %v647 = vmul.f32 %v646, 1.442695
    %v648 = vpow.pop %v647
    %v649 = vadd.f32 %v648, 1.0
    %v650 = vrcp.pop %v649
    %v651 = vmul.f32 1.0, %v650
    %v652 = vadd.f32 %v633, %v133
    %v653 = vmul.f32 %v644, %v652
    %v654 = vadd.f32 %v399, %v653
    %v655 = vtanh.pop %v654
    %v656 = vsub.f32 1.0, %v651
    %v657 = vmul.f32 %v656, %v655
    %v658 = vmul.f32 %v651, 0.0
    %v659 = vadd.f32 %v657, %v658
    %v660 = vpack.c.bf16 %v659, %v659
    %661 = vmatprep.subr.bf16.mxu0 %v531
    %662 = vmatpush1.bf16.msra.mxu0 %v530
    %663 = vmatprep.subr.bf16.mxu0 %v528
    %664 = vmatpush1.bf16.msra.mxu0 %v527
    %665 = vmatprep.subr.bf16.mxu0 %v525
    %666 = vmatpush1.bf16.msra.mxu0 %v524
    %667 = vmatprep.subr.bf16.mxu0 %v522
    %668 = vmatpush1.bf16.msra.mxu0 %v521
    %669 = vmatprep.subr.bf16.mxu0 %v519
    %670 = vmatpush1.bf16.msra.mxu0 %v518
    %671 = vmatprep.subr.bf16.mxu0 %v516
    %672 = vmatpush1.bf16.msra.mxu0 %v515
    %673 = vmatprep.subr.bf16.mxu0 %v513
    %674 = vmatpush1.bf16.msra.mxu0 %v512
    %675 = vmatprep.subr.bf16.mxu0 %v510
    %676 = vmatpush1.bf16.msra.mxu0 %v509
    %677 = vmatprep.subr.bf16.mxu0 0
    %678 = vmatpush2.bf16.msra.mxu0 0
    %679 = vmatprep.subr.bf16.mxu0 0
    %680 = vmatpush2.bf16.msra.mxu0 0
    %681 = vmatprep.subr.bf16.mxu0 0
    %682 = vmatpush2.bf16.msra.mxu0 0
    %683 = vmatprep.subr.bf16.mxu0 0
    %684 = vmatpush2.bf16.msra.mxu0 0
    %685 = vmatprep.subr.bf16.mxu0 0
    %686 = vmatpush2.bf16.msra.mxu0 0
    %687 = vmatprep.subr.bf16.mxu0 0
    %688 = vmatpush2.bf16.msra.mxu0 0
    %689 = vmatprep.subr.bf16.mxu0 0
    %690 = vmatpush2.bf16.msra.mxu0 0
    %691 = vmatprep.subr.bf16.mxu0 0
    %692 = vmatpush2.bf16.msra.mxu0 0
    %693 = vmatprep.mubr.bf16.mxu0 0
    %694 = vmatmul.mubr.bf16.gmra.mxu0 %v660
    %v695 = vpop.f32.mrf.mxu0
    %v696 = vadd.f32 0.0, %v695
    %v697 = vpop.f32.mrf.mxu0
    %v698 = vadd.f32 0.0, %v697
    %v699 = vpop.f32.mrf.mxu0
    %v700 = vpop.f32.mrf.mxu0
    %701 = vdwg.mxu0
    %702 = vmatprep.subr.bf16.mxu0 0
    %703 = vmatpush1.bf16.msra.mxu0 %v532
    %704 = vmatprep.subr.bf16.mxu0 0
    %705 = vmatpush1.bf16.msra.mxu0 %v529
    %706 = vmatprep.subr.bf16.mxu0 0
    %707 = vmatpush1.bf16.msra.mxu0 %v526
    %708 = vmatprep.subr.bf16.mxu0 0
    %709 = vmatpush1.bf16.msra.mxu0 %v523
    %710 = vmatprep.subr.bf16.mxu0 0
    %711 = vmatpush1.bf16.msra.mxu0 %v520
    %712 = vmatprep.subr.bf16.mxu0 0
    %713 = vmatpush1.bf16.msra.mxu0 %v517
    %714 = vmatprep.subr.bf16.mxu0 0
    %715 = vmatpush1.bf16.msra.mxu0 %v514
    %716 = vmatprep.subr.bf16.mxu0 0
    %717 = vmatpush1.bf16.msra.mxu0 %v511
    %718 = vmatprep.subr.bf16.mxu0 0
    %719 = vmatpush2.bf16.msra.mxu0 0
    %720 = vmatprep.subr.bf16.mxu0 0
    %721 = vmatpush2.bf16.msra.mxu0 0
    %722 = vmatprep.subr.bf16.mxu0 0
    %723 = vmatpush2.bf16.msra.mxu0 0
    %724 = vmatprep.subr.bf16.mxu0 0
    %725 = vmatpush2.bf16.msra.mxu0 0
    %726 = vmatprep.subr.bf16.mxu0 0
    %727 = vmatpush2.bf16.msra.mxu0 0
    %728 = vmatprep.subr.bf16.mxu0 0
    %729 = vmatpush2.bf16.msra.mxu0 0
    %730 = vmatprep.subr.bf16.mxu0 0
    %731 = vmatpush2.bf16.msra.mxu0 0
    %732 = vmatprep.subr.bf16.mxu0 0
    %733 = vmatpush2.bf16.msra.mxu0 0
    %734 = vmatprep.mubr.bf16.mxu0 0
    %735 = vmatmul.mubr.bf16.gmra.mxu0 %v660
    %v736 = vpop.f32.mrf.mxu0
    %v737 = vadd.f32 0.0, %v736
    %v738 = vpop.f32.mrf.mxu0
    %v739 = vpop.f32.mrf.mxu0
    %v740 = vpop.f32.mrf.mxu0
    %741 = vdwg.mxu0
    %v742 = vadd.f32 %v330, %v696
    %v743 = vxor.u32 %v742, 2147483648
    %v744 = vmul.f32 %v743, 1.442695
    %v745 = vpow.pop %v744
    %v746 = vadd.f32 %v745, 1.0
    %v747 = vrcp.pop %v746
    %v748 = vmul.f32 1.0, %v747
    %v749 = vadd.f32 %v332, %v698
    %v750 = vxor.u32 %v749, 2147483648
    %v751 = vmul.f32 %v750, 1.442695
    %v752 = vpow.pop %v751
    %v753 = vadd.f32 %v752, 1.0
    %v754 = vrcp.pop %v753
    %v755 = vmul.f32 1.0, %v754
    %v756 = vadd.f32 %v737, %v133
    %v757 = vmul.f32 %v748, %v756
    %v758 = vadd.f32 %v402, %v757
    %v759 = vtanh.pop %v758
    %v760 = vsub.f32 1.0, %v755
    %v761 = vmul.f32 %v760, %v759
    %v762 = vmul.f32 %v755, %v659
    %v763 = vadd.f32 %v761, %v762
    %v764 = vpack.c.bf16 %v763, %v763
    %765 = vmatprep.subr.bf16.mxu0 %v531
    %766 = vmatpush1.bf16.msra.mxu0 %v530
    %767 = vmatprep.subr.bf16.mxu0 %v528
    %768 = vmatpush1.bf16.msra.mxu0 %v527
    %769 = vmatprep.subr.bf16.mxu0 %v525
    %770 = vmatpush1.bf16.msra.mxu0 %v524
    %771 = vmatprep.subr.bf16.mxu0 %v522
    %772 = vmatpush1.bf16.msra.mxu0 %v521
    %773 = vmatprep.subr.bf16.mxu0 %v519
    %774 = vmatpush1.bf16.msra.mxu0 %v518
    %775 = vmatprep.subr.bf16.mxu0 %v516
    %776 = vmatpush1.bf16.msra.mxu0 %v515
    %777 = vmatprep.subr.bf16.mxu0 %v513
    %778 = vmatpush1.bf16.msra.mxu0 %v512
    %779 = vmatprep.subr.bf16.mxu0 %v510
    %780 = vmatpush1.bf16.msra.mxu0 %v509
    %781 = vmatprep.subr.bf16.mxu0 0
    %782 = vmatpush2.bf16.msra.mxu0 0
    %783 = vmatprep.subr.bf16.mxu0 0
    %784 = vmatpush2.bf16.msra.mxu0 0
    %785 = vmatprep.subr.bf16.mxu0 0
    %786 = vmatpush2.bf16.msra.mxu0 0
    %787 = vmatprep.subr.bf16.mxu0 0
    %788 = vmatpush2.bf16.msra.mxu0 0
    %789 = vmatprep.subr.bf16.mxu0 0
    %790 = vmatpush2.bf16.msra.mxu0 0
    %791 = vmatprep.subr.bf16.mxu0 0
    %792 = vmatpush2.bf16.msra.mxu0 0
    %793 = vmatprep.subr.bf16.mxu0 0
    %794 = vmatpush2.bf16.msra.mxu0 0
    %795 = vmatprep.subr.bf16.mxu0 0
    %796 = vmatpush2.bf16.msra.mxu0 0
    %797 = vmatprep.mubr.bf16.mxu0 0
    %798 = vmatmul.mubr.bf16.gmra.mxu0 %v764
    %v799 = vpop.f32.mrf.mxu0
    %v800 = vadd.f32 0.0, %v799
    %v801 = vpop.f32.mrf.mxu0
    %v802 = vadd.f32 0.0, %v801
    %v803 = vpop.f32.mrf.mxu0
    %v804 = vpop.f32.mrf.mxu0
    %805 = vdwg.mxu0
    %806 = vmatprep.subr.bf16.mxu0 0
    %807 = vmatpush1.bf16.msra.mxu0 %v532
    %808 = vmatprep.subr.bf16.mxu0 0
    %809 = vmatpush1.bf16.msra.mxu0 %v529
    %810 = vmatprep.subr.bf16.mxu0 0
    %811 = vmatpush1.bf16.msra.mxu0 %v526
    %812 = vmatprep.subr.bf16.mxu0 0
    %813 = vmatpush1.bf16.msra.mxu0 %v523
    %814 = vmatprep.subr.bf16.mxu0 0
    %815 = vmatpush1.bf16.msra.mxu0 %v520
    %816 = vmatprep.subr.bf16.mxu0 0
    %817 = vmatpush1.bf16.msra.mxu0 %v517
    %818 = vmatprep.subr.bf16.mxu0 0
    %819 = vmatpush1.bf16.msra.mxu0 %v514
    %820 = vmatprep.subr.bf16.mxu0 0
    %821 = vmatpush1.bf16.msra.mxu0 %v511
    %822 = vmatprep.subr.bf16.mxu0 0
    %823 = vmatpush2.bf16.msra.mxu0 0
    %824 = vmatprep.subr.bf16.mxu0 0
    %825 = vmatpush2.bf16.msra.mxu0 0
    %826 = vmatprep.subr.bf16.mxu0 0
    %827 = vmatpush2.bf16.msra.mxu0 0
    %828 = vmatprep.subr.bf16.mxu0 0
    %829 = vmatpush2.bf16.msra.mxu0 0
    %830 = vmatprep.subr.bf16.mxu0 0
    %831 = vmatpush2.bf16.msra.mxu0 0
    %832 = vmatprep.subr.bf16.mxu0 0
    %833 = vmatpush2.bf16.msra.mxu0 0
    %834 = vmatprep.subr.bf16.mxu0 0
    %835 = vmatpush2.bf16.msra.mxu0 0
    %836 = vmatprep.subr.bf16.mxu0 0
    %837 = vmatpush2.bf16.msra.mxu0 0
    %838 = vmatprep.mubr.bf16.mxu0 0
    %839 = vmatmul.mubr.bf16.gmra.mxu0 %v764
    %v840 = vpop.f32.mrf.mxu0
    %v841 = vadd.f32 0.0, %v840
    %v842 = vpop.f32.mrf.mxu0
    %v843 = vpop.f32.mrf.mxu0
    %v844 = vpop.f32.mrf.mxu0
    %845 = vdwg.mxu0
    %v846 = vadd.f32 %v336, %v800
    %v847 = vxor.u32 %v846, 2147483648
    %v848 = vmul.f32 %v847, 1.442695
    %v849 = vpow.pop %v848
    %v850 = vadd.f32 %v849, 1.0
    %v851 = vrcp.pop %v850
    %v852 = vmul.f32 1.0, %v851
    %v853 = vadd.f32 %v338, %v802
    %v854 = vxor.u32 %v853, 2147483648
    %v855 = vmul.f32 %v854, 1.442695
    %v856 = vpow.pop %v855
    %v857 = vadd.f32 %v856, 1.0
    %v858 = vrcp.pop %v857
    %v859 = vmul.f32 1.0, %v858
    %v860 = vadd.f32 %v841, %v133
    %v861 = vmul.f32 %v852, %v860
    %v862 = vadd.f32 %v407, %v861
    %v863 = vtanh.pop %v862
    %v864 = vsub.f32 1.0, %v859
    %v865 = vmul.f32 %v864, %v863
    %v866 = vmul.f32 %v859, %v763
    %v867 = vadd.f32 %v865, %v866
    %v868 = vpack.c.bf16 %v867, %v867
    %869 = vmatprep.subr.bf16.mxu0 %v531
    %870 = vmatpush1.bf16.msra.mxu0 %v530
    %871 = vmatprep.subr.bf16.mxu0 %v528
    %872 = vmatpush1.bf16.msra.mxu0 %v527
    %873 = vmatprep.subr.bf16.mxu0 %v525
    %874 = vmatpush1.bf16.msra.mxu0 %v524
    %875 = vmatprep.subr.bf16.mxu0 %v522
    %876 = vmatpush1.bf16.msra.mxu0 %v521
    %877 = vmatprep.subr.bf16.mxu0 %v519
    %878 = vmatpush1.bf16.msra.mxu0 %v518
    %879 = vmatprep.subr.bf16.mxu0 %v516
    %880 = vmatpush1.bf16.msra.mxu0 %v515
    %881 = vmatprep.subr.bf16.mxu0 %v513
    %882 = vmatpush1.bf16.msra.mxu0 %v512
    %883 = vmatprep.subr.bf16.mxu0 %v510
    %884 = vmatpush1.bf16.msra.mxu0 %v509
    %885 = vmatprep.subr.bf16.mxu0 0
    %886 = vmatpush2.bf16.msra.mxu0 0
    %887 = vmatprep.subr.bf16.mxu0 0
    %888 = vmatpush2.bf16.msra.mxu0 0
    %889 = vmatprep.subr.bf16.mxu0 0
    %890 = vmatpush2.bf16.msra.mxu0 0
    %891 = vmatprep.subr.bf16.mxu0 0
    %892 = vmatpush2.bf16.msra.mxu0 0
    %893 = vmatprep.subr.bf16.mxu0 0
    %894 = vmatpush2.bf16.msra.mxu0 0
    %895 = vmatprep.subr.bf16.mxu0 0
    %896 = vmatpush2.bf16.msra.mxu0 0
    %897 = vmatprep.subr.bf16.mxu0 0
    %898 = vmatpush2.bf16.msra.mxu0 0
    %899 = vmatprep.subr.bf16.mxu0 0
    %900 = vmatpush2.bf16.msra.mxu0 0
    %901 = vmatprep.mubr.bf16.mxu0 0
    %902 = vmatmul.mubr.bf16.gmra.mxu0 %v868
    %v903 = vpop.f32.mrf.mxu0
    %v904 = vadd.f32 0.0, %v903
    %v905 = vpop.f32.mrf.mxu0
    %v906 = vadd.f32 0.0, %v905
    %v907 = vpop.f32.mrf.mxu0
    %v908 = vpop.f32.mrf.mxu0
    %909 = vdwg.mxu0
    %910 = vmatprep.subr.bf16.mxu0 0
    %911 = vmatpush1.bf16.msra.mxu0 %v532
    %912 = vmatprep.subr.bf16.mxu0 0
    %913 = vmatpush1.bf16.msra.mxu0 %v529
    %914 = vmatprep.subr.bf16.mxu0 0
    %915 = vmatpush1.bf16.msra.mxu0 %v526
    %916 = vmatprep.subr.bf16.mxu0 0
    %917 = vmatpush1.bf16.msra.mxu0 %v523
    %918 = vmatprep.subr.bf16.mxu0 0
    %919 = vmatpush1.bf16.msra.mxu0 %v520
    %920 = vmatprep.subr.bf16.mxu0 0
    %921 = vmatpush1.bf16.msra.mxu0 %v517
    %922 = vmatprep.subr.bf16.mxu0 0
    %923 = vmatpush1.bf16.msra.mxu0 %v514
    %924 = vmatprep.subr.bf16.mxu0 0
    %925 = vmatpush1.bf16.msra.mxu0 %v511
    %926 = vmatprep.subr.bf16.mxu0 0
    %927 = vmatpush2.bf16.msra.mxu0 0
    %928 = vmatprep.subr.bf16.mxu0 0
    %929 = vmatpush2.bf16.msra.mxu0 0
    %930 = vmatprep.subr.bf16.mxu0 0
    %931 = vmatpush2.bf16.msra.mxu0 0
    %932 = vmatprep.subr.bf16.mxu0 0
    %933 = vmatpush2.bf16.msra.mxu0 0
    %934 = vmatprep.subr.bf16.mxu0 0
    %935 = vmatpush2.bf16.msra.mxu0 0
    %936 = vmatprep.subr.bf16.mxu0 0
    %937 = vmatpush2.bf16.msra.mxu0 0
    %938 = vmatprep.subr.bf16.mxu0 0
    %939 = vmatpush2.bf16.msra.mxu0 0
    %940 = vmatprep.subr.bf16.mxu0 0
    %941 = vmatpush2.bf16.msra.mxu0 0
    %942 = vmatprep.mubr.bf16.mxu0 0
    %943 = vmatmul.mubr.bf16.gmra.mxu0 %v868
    %v944 = vpop.f32.mrf.mxu0
    %v945 = vadd.f32 0.0, %v944
    %v946 = vpop.f32.mrf.mxu0
    %v947 = vpop.f32.mrf.mxu0
    %v948 = vpop.f32.mrf.mxu0
    %949 = vdwg.mxu0
    %v950 = vadd.f32 %v340, %v904
    %v951 = vxor.u32 %v950, 2147483648
    %v952 = vmul.f32 %v951, 1.442695
    %v953 = vpow.pop %v952
    %v954 = vadd.f32 %v953, 1.0
    %v955 = vrcp.pop %v954
    %v956 = vmul.f32 1.0, %v955
    %v957 = vadd.f32 %v342, %v906
    %v958 = vxor.u32 %v957, 2147483648
    %v959 = vmul.f32 %v958, 1.442695
    %v960 = vpow.pop %v959
    %v961 = vadd.f32 %v960, 1.0
    %v962 = vrcp.pop %v961
    %v963 = vmul.f32 1.0, %v962
    %v964 = vadd.f32 %v945, %v133
    %v965 = vmul.f32 %v956, %v964
    %v966 = vadd.f32 %v410, %v965
    %v967 = vtanh.pop %v966
    %v968 = vsub.f32 1.0, %v963
    %v969 = vmul.f32 %v968, %v967
    %v970 = vmul.f32 %v963, %v867
    %v971 = vadd.f32 %v969, %v970
    %v972 = vpack.c.bf16 %v971, %v971
    %973 = vmatprep.subr.bf16.mxu0 %v531
    %974 = vmatpush1.bf16.msra.mxu0 %v530
    %975 = vmatprep.subr.bf16.mxu0 %v528
    %976 = vmatpush1.bf16.msra.mxu0 %v527
    %977 = vmatprep.subr.bf16.mxu0 %v525
    %978 = vmatpush1.bf16.msra.mxu0 %v524
    %979 = vmatprep.subr.bf16.mxu0 %v522
    %980 = vmatpush1.bf16.msra.mxu0 %v521
    %981 = vmatprep.subr.bf16.mxu0 %v519
    %982 = vmatpush1.bf16.msra.mxu0 %v518
    %983 = vmatprep.subr.bf16.mxu0 %v516
    %984 = vmatpush1.bf16.msra.mxu0 %v515
    %985 = vmatprep.subr.bf16.mxu0 %v513
    %986 = vmatpush1.bf16.msra.mxu0 %v512
    %987 = vmatprep.subr.bf16.mxu0 %v510
    %988 = vmatpush1.bf16.msra.mxu0 %v509
    %989 = vmatprep.subr.bf16.mxu0 0
    %990 = vmatpush2.bf16.msra.mxu0 0
    %991 = vmatprep.subr.bf16.mxu0 0
    %992 = vmatpush2.bf16.msra.mxu0 0
    %993 = vmatprep.subr.bf16.mxu0 0
    %994 = vmatpush2.bf16.msra.mxu0 0
    %995 = vmatprep.subr.bf16.mxu0 0
    %996 = vmatpush2.bf16.msra.mxu0 0
    %997 = vmatprep.subr.bf16.mxu0 0
    %998 = vmatpush2.bf16.msra.mxu0 0
    %999 = vmatprep.subr.bf16.mxu0 0
    %1000 = vmatpush2.bf16.msra.mxu0 0
    %1001 = vmatprep.subr.bf16.mxu0 0
    %1002 = vmatpush2.bf16.msra.mxu0 0
    %1003 = vmatprep.subr.bf16.mxu0 0
    %1004 = vmatpush2.bf16.msra.mxu0 0
    %1005 = vmatprep.mubr.bf16.mxu0 0
    %1006 = vmatmul.mubr.bf16.gmra.mxu0 %v972
    %v1007 = vpop.f32.mrf.mxu0
    %v1008 = vadd.f32 0.0, %v1007
    %v1009 = vpop.f32.mrf.mxu0
    %v1010 = vadd.f32 0.0, %v1009
    %v1011 = vpop.f32.mrf.mxu0
    %v1012 = vpop.f32.mrf.mxu0
    %1013 = vdwg.mxu0
    %1014 = vmatprep.subr.bf16.mxu0 0
    %1015 = vmatpush1.bf16.msra.mxu0 %v532
    %1016 = vmatprep.subr.bf16.mxu0 0
    %1017 = vmatpush1.bf16.msra.mxu0 %v529
    %1018 = vmatprep.subr.bf16.mxu0 0
    %1019 = vmatpush1.bf16.msra.mxu0 %v526
    %1020 = vmatprep.subr.bf16.mxu0 0
    %1021 = vmatpush1.bf16.msra.mxu0 %v523
    %1022 = vmatprep.subr.bf16.mxu0 0
    %1023 = vmatpush1.bf16.msra.mxu0 %v520
    %1024 = vmatprep.subr.bf16.mxu0 0
    %1025 = vmatpush1.bf16.msra.mxu0 %v517
    %1026 = vmatprep.subr.bf16.mxu0 0
    %1027 = vmatpush1.bf16.msra.mxu0 %v514
    %1028 = vmatprep.subr.bf16.mxu0 0
    %1029 = vmatpush1.bf16.msra.mxu0 %v511
    %1030 = vmatprep.subr.bf16.mxu0 0
    %1031 = vmatpush2.bf16.msra.mxu0 0
    %1032 = vmatprep.subr.bf16.mxu0 0
    %1033 = vmatpush2.bf16.msra.mxu0 0
    %1034 = vmatprep.subr.bf16.mxu0 0
    %1035 = vmatpush2.bf16.msra.mxu0 0
    %1036 = vmatprep.subr.bf16.mxu0 0
    %1037 = vmatpush2.bf16.msra.mxu0 0
    %1038 = vmatprep.subr.bf16.mxu0 0
    %1039 = vmatpush2.bf16.msra.mxu0 0
    %1040 = vmatprep.subr.bf16.mxu0 0
    %1041 = vmatpush2.bf16.msra.mxu0 0
    %1042 = vmatprep.subr.bf16.mxu0 0
    %1043 = vmatpush2.bf16.msra.mxu0 0
    %1044 = vmatprep.subr.bf16.mxu0 0
    %1045 = vmatpush2.bf16.msra.mxu0 0
    %1046 = vmatprep.mubr.bf16.mxu0 0
    %1047 = vmatmul.mubr.bf16.gmra.mxu0 %v972
    %v1048 = vpop.f32.mrf.mxu0
    %v1049 = vadd.f32 0.0, %v1048
    %v1050 = vpop.f32.mrf.mxu0
    %v1051 = vpop.f32.mrf.mxu0
    %v1052 = vpop.f32.mrf.mxu0
    %1053 = vdwg.mxu0
    %v1054 = vadd.f32 %v346, %v1008
    %v1055 = vxor.u32 %v1054, 2147483648
    %v1056 = vmul.f32 %v1055, 1.442695
    %v1057 = vpow.pop %v1056
    %v1058 = vadd.f32 %v1057, 1.0
    %v1059 = vrcp.pop %v1058
    %v1060 = vmul.f32 1.0, %v1059
    %v1061 = vadd.f32 %v348, %v1010
    %v1062 = vxor.u32 %v1061, 2147483648
    %v1063 = vmul.f32 %v1062, 1.442695
    %v1064 = vpow.pop %v1063
    %v1065 = vadd.f32 %v1064, 1.0
    %v1066 = vrcp.pop %v1065
    %v1067 = vmul.f32 1.0, %v1066
    %v1068 = vadd.f32 %v1049, %v133
    %v1069 = vmul.f32 %v1060, %v1068
    %v1070 = vadd.f32 %v415, %v1069
    %v1071 = vtanh.pop %v1070
    %v1072 = vsub.f32 1.0, %v1067
    %v1073 = vmul.f32 %v1072, %v1071
    %v1074 = vmul.f32 %v1067, %v971
    %v1075 = vadd.f32 %v1073, %v1074
    %v1076 = vpack.c.bf16 %v1075, %v1075
    %1077 = vmatprep.subr.bf16.mxu0 %v531
    %1078 = vmatpush1.bf16.msra.mxu0 %v530
    %1079 = vmatprep.subr.bf16.mxu0 %v528
    %1080 = vmatpush1.bf16.msra.mxu0 %v527
    %1081 = vmatprep.subr.bf16.mxu0 %v525
    %1082 = vmatpush1.bf16.msra.mxu0 %v524
    %1083 = vmatprep.subr.bf16.mxu0 %v522
    %1084 = vmatpush1.bf16.msra.mxu0 %v521
    %1085 = vmatprep.subr.bf16.mxu0 %v519
    %1086 = vmatpush1.bf16.msra.mxu0 %v518
    %1087 = vmatprep.subr.bf16.mxu0 %v516
    %1088 = vmatpush1.bf16.msra.mxu0 %v515
    %1089 = vmatprep.subr.bf16.mxu0 %v513
    %1090 = vmatpush1.bf16.msra.mxu0 %v512
    %1091 = vmatprep.subr.bf16.mxu0 %v510
    %1092 = vmatpush1.bf16.msra.mxu0 %v509
    %1093 = vmatprep.subr.bf16.mxu0 0
    %1094 = vmatpush2.bf16.msra.mxu0 0
    %1095 = vmatprep.subr.bf16.mxu0 0
    %1096 = vmatpush2.bf16.msra.mxu0 0
    %1097 = vmatprep.subr.bf16.mxu0 0
    %1098 = vmatpush2.bf16.msra.mxu0 0
    %1099 = vmatprep.subr.bf16.mxu0 0
    %1100 = vmatpush2.bf16.msra.mxu0 0
    %1101 = vmatprep.subr.bf16.mxu0 0
    %1102 = vmatpush2.bf16.msra.mxu0 0
    %1103 = vmatprep.subr.bf16.mxu0 0
    %1104 = vmatpush2.bf16.msra.mxu0 0
    %1105 = vmatprep.subr.bf16.mxu0 0
    %1106 = vmatpush2.bf16.msra.mxu0 0
    %1107 = vmatprep.subr.bf16.mxu0 0
    %1108 = vmatpush2.bf16.msra.mxu0 0
    %1109 = vmatprep.mubr.bf16.mxu0 0
    %1110 = vmatmul.mubr.bf16.gmra.mxu0 %v1076
    %v1111 = vpop.f32.mrf.mxu0
    %v1112 = vadd.f32 0.0, %v1111
    %v1113 = vpop.f32.mrf.mxu0
    %v1114 = vadd.f32 0.0, %v1113
    %v1115 = vpop.f32.mrf.mxu0
    %v1116 = vpop.f32.mrf.mxu0
    %1117 = vdwg.mxu0
    %1118 = vmatprep.subr.bf16.mxu0 0
    %1119 = vmatpush1.bf16.msra.mxu0 %v532
    %1120 = vmatprep.subr.bf16.mxu0 0
    %1121 = vmatpush1.bf16.msra.mxu0 %v529
    %1122 = vmatprep.subr.bf16.mxu0 0
    %1123 = vmatpush1.bf16.msra.mxu0 %v526
    %1124 = vmatprep.subr.bf16.mxu0 0
    %1125 = vmatpush1.bf16.msra.mxu0 %v523
    %1126 = vmatprep.subr.bf16.mxu0 0
    %1127 = vmatpush1.bf16.msra.mxu0 %v520
    %1128 = vmatprep.subr.bf16.mxu0 0
    %1129 = vmatpush1.bf16.msra.mxu0 %v517
    %1130 = vmatprep.subr.bf16.mxu0 0
    %1131 = vmatpush1.bf16.msra.mxu0 %v514
    %1132 = vmatprep.subr.bf16.mxu0 0
    %1133 = vmatpush1.bf16.msra.mxu0 %v511
    %1134 = vmatprep.subr.bf16.mxu0 0
    %1135 = vmatpush2.bf16.msra.mxu0 0
    %1136 = vmatprep.subr.bf16.mxu0 0
    %1137 = vmatpush2.bf16.msra.mxu0 0
    %1138 = vmatprep.subr.bf16.mxu0 0
    %1139 = vmatpush2.bf16.msra.mxu0 0
    %1140 = vmatprep.subr.bf16.mxu0 0
    %1141 = vmatpush2.bf16.msra.mxu0 0
    %1142 = vmatprep.subr.bf16.mxu0 0
    %1143 = vmatpush2.bf16.msra.mxu0 0
    %1144 = vmatprep.subr.bf16.mxu0 0
    %1145 = vmatpush2.bf16.msra.mxu0 0
    %1146 = vmatprep.subr.bf16.mxu0 0
    %1147 = vmatpush2.bf16.msra.mxu0 0
    %1148 = vmatprep.subr.bf16.mxu0 0
    %1149 = vmatpush2.bf16.msra.mxu0 0
    %1150 = vmatprep.mubr.bf16.mxu0 0
    %1151 = vmatmul.mubr.bf16.gmra.mxu0 %v1076
    %v1152 = vpop.f32.mrf.mxu0
    %v1153 = vadd.f32 0.0, %v1152
    %v1154 = vpop.f32.mrf.mxu0
    %v1155 = vpop.f32.mrf.mxu0
    %v1156 = vpop.f32.mrf.mxu0
    %1157 = vdwg.mxu0
    %v1158 = vadd.f32 %v350, %v1112
    %v1159 = vxor.u32 %v1158, 2147483648
    %v1160 = vmul.f32 %v1159, 1.442695
    %v1161 = vpow.pop %v1160
    %v1162 = vadd.f32 %v1161, 1.0
    %v1163 = vrcp.pop %v1162
    %v1164 = vmul.f32 1.0, %v1163
    %v1165 = vadd.f32 %v352, %v1114
    %v1166 = vxor.u32 %v1165, 2147483648
    %v1167 = vmul.f32 %v1166, 1.442695
    %v1168 = vpow.pop %v1167
    %v1169 = vadd.f32 %v1168, 1.0
    %v1170 = vrcp.pop %v1169
    %v1171 = vmul.f32 1.0, %v1170
    %v1172 = vadd.f32 %v1153, %v133
    %v1173 = vmul.f32 %v1164, %v1172
    %v1174 = vadd.f32 %v418, %v1173
    %v1175 = vtanh.pop %v1174
    %v1176 = vsub.f32 1.0, %v1171
    %v1177 = vmul.f32 %v1176, %v1175
    %v1178 = vmul.f32 %v1171, %v1075
    %v1179 = vadd.f32 %v1177, %v1178
    %v1180 = vpack.c.bf16 %v1179, %v1179
    %1181 = vmatprep.subr.bf16.mxu0 %v531
    %1182 = vmatpush1.bf16.msra.mxu0 %v530
    %1183 = vmatprep.subr.bf16.mxu0 %v528
    %1184 = vmatpush1.bf16.msra.mxu0 %v527
    %1185 = vmatprep.subr.bf16.mxu0 %v525
    %1186 = vmatpush1.bf16.msra.mxu0 %v524
    %1187 = vmatprep.subr.bf16.mxu0 %v522
    %1188 = vmatpush1.bf16.msra.mxu0 %v521
    %1189 = vmatprep.subr.bf16.mxu0 %v519
    %1190 = vmatpush1.bf16.msra.mxu0 %v518
    %1191 = vmatprep.subr.bf16.mxu0 %v516
    %1192 = vmatpush1.bf16.msra.mxu0 %v515
    %1193 = vmatprep.subr.bf16.mxu0 %v513
    %1194 = vmatpush1.bf16.msra.mxu0 %v512
    %1195 = vmatprep.subr.bf16.mxu0 %v510
    %1196 = vmatpush1.bf16.msra.mxu0 %v509
    %1197 = vmatprep.subr.bf16.mxu0 0
    %1198 = vmatpush2.bf16.msra.mxu0 0
    %1199 = vmatprep.subr.bf16.mxu0 0
    %1200 = vmatpush2.bf16.msra.mxu0 0
    %1201 = vmatprep.subr.bf16.mxu0 0
    %1202 = vmatpush2.bf16.msra.mxu0 0
    %1203 = vmatprep.subr.bf16.mxu0 0
    %1204 = vmatpush2.bf16.msra.mxu0 0
    %1205 = vmatprep.subr.bf16.mxu0 0
    %1206 = vmatpush2.bf16.msra.mxu0 0
    %1207 = vmatprep.subr.bf16.mxu0 0
    %1208 = vmatpush2.bf16.msra.mxu0 0
    %1209 = vmatprep.subr.bf16.mxu0 0
    %1210 = vmatpush2.bf16.msra.mxu0 0
    %1211 = vmatprep.subr.bf16.mxu0 0
    %1212 = vmatpush2.bf16.msra.mxu0 0
    %1213 = vmatprep.mubr.bf16.mxu0 0
    %1214 = vmatmul.mubr.bf16.gmra.mxu0 %v1180
    %v1215 = vpop.f32.mrf.mxu0
    %v1216 = vadd.f32 0.0, %v1215
    %v1217 = vpop.f32.mrf.mxu0
    %v1218 = vadd.f32 0.0, %v1217
    %v1219 = vpop.f32.mrf.mxu0
    %v1220 = vpop.f32.mrf.mxu0
    %1221 = vdwg.mxu0
    %1222 = vmatprep.subr.bf16.mxu0 0
    %1223 = vmatpush1.bf16.msra.mxu0 %v532
    %1224 = vmatprep.subr.bf16.mxu0 0
    %1225 = vmatpush1.bf16.msra.mxu0 %v529
    %1226 = vmatprep.subr.bf16.mxu0 0
    %1227 = vmatpush1.bf16.msra.mxu0 %v526
    %1228 = vmatprep.subr.bf16.mxu0 0
    %1229 = vmatpush1.bf16.msra.mxu0 %v523
    %1230 = vmatprep.subr.bf16.mxu0 0
    %1231 = vmatpush1.bf16.msra.mxu0 %v520
    %1232 = vmatprep.subr.bf16.mxu0 0
    %1233 = vmatpush1.bf16.msra.mxu0 %v517
    %1234 = vmatprep.subr.bf16.mxu0 0
    %1235 = vmatpush1.bf16.msra.mxu0 %v514
    %1236 = vmatprep.subr.bf16.mxu0 0
    %1237 = vmatpush1.bf16.msra.mxu0 %v511
    %1238 = vmatprep.subr.bf16.mxu0 0
    %1239 = vmatpush2.bf16.msra.mxu0 0
    %1240 = vmatprep.subr.bf16.mxu0 0
    %1241 = vmatpush2.bf16.msra.mxu0 0
    %1242 = vmatprep.subr.bf16.mxu0 0
    %1243 = vmatpush2.bf16.msra.mxu0 0
    %1244 = vmatprep.subr.bf16.mxu0 0
    %1245 = vmatpush2.bf16.msra.mxu0 0
    %1246 = vmatprep.subr.bf16.mxu0 0
    %1247 = vmatpush2.bf16.msra.mxu0 0
    %1248 = vmatprep.subr.bf16.mxu0 0
    %1249 = vmatpush2.bf16.msra.mxu0 0
    %1250 = vmatprep.subr.bf16.mxu0 0
    %1251 = vmatpush2.bf16.msra.mxu0 0
    %1252 = vmatprep.subr.bf16.mxu0 0
    %1253 = vmatpush2.bf16.msra.mxu0 0
    %1254 = vmatprep.mubr.bf16.mxu0 0
    %1255 = vmatmul.mubr.bf16.gmra.mxu0 %v1180
    %v1256 = vpop.f32.mrf.mxu0
    %v1257 = vadd.f32 0.0, %v1256
    %v1258 = vpop.f32.mrf.mxu0
    %v1259 = vpop.f32.mrf.mxu0
    %v1260 = vpop.f32.mrf.mxu0
    %1261 = vdwg.mxu0
    %v1262 = vadd.f32 %v356, %v1216
    %v1263 = vxor.u32 %v1262, 2147483648
    %v1264 = vmul.f32 %v1263, 1.442695
    %v1265 = vpow.pop %v1264
    %v1266 = vadd.f32 %v1265, 1.0
    %v1267 = vrcp.pop %v1266
    %v1268 = vmul.f32 1.0, %v1267
    %v1269 = vadd.f32 %v358, %v1218
    %v1270 = vxor.u32 %v1269, 2147483648
    %v1271 = vmul.f32 %v1270, 1.442695
    %v1272 = vpow.pop %v1271
    %v1273 = vadd.f32 %v1272, 1.0
    %v1274 = vrcp.pop %v1273
    %v1275 = vmul.f32 1.0, %v1274
    %v1276 = vadd.f32 %v1257, %v133
    %v1277 = vmul.f32 %v1268, %v1276
    %v1278 = vadd.f32 %v423, %v1277
    %v1279 = vtanh.pop %v1278
    %v1280 = vsub.f32 1.0, %v1275
    %v1281 = vmul.f32 %v1280, %v1279
    %v1282 = vmul.f32 %v1275, %v1179
    %v1283 = vadd.f32 %v1281, %v1282
    %v1284 = vpack.c.bf16 %v1283, %v1283
    %1285 = vmatprep.subr.bf16.mxu0 %v531
    %1286 = vmatpush1.bf16.msra.mxu0 %v530
    %1287 = vmatprep.subr.bf16.mxu0 %v528
    %1288 = vmatpush1.bf16.msra.mxu0 %v527
    %1289 = vmatprep.subr.bf16.mxu0 %v525
    %1290 = vmatpush1.bf16.msra.mxu0 %v524
    %1291 = vmatprep.subr.bf16.mxu0 %v522
    %1292 = vmatpush1.bf16.msra.mxu0 %v521
    %1293 = vmatprep.subr.bf16.mxu0 %v519
    %1294 = vmatpush1.bf16.msra.mxu0 %v518
    %1295 = vmatprep.subr.bf16.mxu0 %v516
    %1296 = vmatpush1.bf16.msra.mxu0 %v515
    %1297 = vmatprep.subr.bf16.mxu0 %v513
    %1298 = vmatpush1.bf16.msra.mxu0 %v512
    %1299 = vmatprep.subr.bf16.mxu0 %v510
    %1300 = vmatpush1.bf16.msra.mxu0 %v509
    %1301 = vmatprep.subr.bf16.mxu0 0
    %1302 = vmatpush2.bf16.msra.mxu0 0
    %1303 = vmatprep.subr.bf16.mxu0 0
    %1304 = vmatpush2.bf16.msra.mxu0 0
    %1305 = vmatprep.subr.bf16.mxu0 0
    %1306 = vmatpush2.bf16.msra.mxu0 0
    %1307 = vmatprep.subr.bf16.mxu0 0
    %1308 = vmatpush2.bf16.msra.mxu0 0
    %1309 = vmatprep.subr.bf16.mxu0 0
    %1310 = vmatpush2.bf16.msra.mxu0 0
    %1311 = vmatprep.subr.bf16.mxu0 0
    %1312 = vmatpush2.bf16.msra.mxu0 0
    %1313 = vmatprep.subr.bf16.mxu0 0
    %1314 = vmatpush2.bf16.msra.mxu0 0
    %1315 = vmatprep.subr.bf16.mxu0 0
    %1316 = vmatpush2.bf16.msra.mxu0 0
    %1317 = vmatprep.mubr.bf16.mxu0 0
    %1318 = vmatmul.mubr.bf16.gmra.mxu0 %v1284
    %v1319 = vpop.f32.mrf.mxu0
    %v1320 = vadd.f32 0.0, %v1319
    %v1321 = vpop.f32.mrf.mxu0
    %v1322 = vadd.f32 0.0, %v1321
    %v1323 = vpop.f32.mrf.mxu0
    %v1324 = vpop.f32.mrf.mxu0
    %1325 = vdwg.mxu0
    %1326 = vmatprep.subr.bf16.mxu0 0
    %1327 = vmatpush1.bf16.msra.mxu0 %v532
    %1328 = vmatprep.subr.bf16.mxu0 0
    %1329 = vmatpush1.bf16.msra.mxu0 %v529
    %1330 = vmatprep.subr.bf16.mxu0 0
    %1331 = vmatpush1.bf16.msra.mxu0 %v526
    %1332 = vmatprep.subr.bf16.mxu0 0
    %1333 = vmatpush1.bf16.msra.mxu0 %v523
    %1334 = vmatprep.subr.bf16.mxu0 0
    %1335 = vmatpush1.bf16.msra.mxu0 %v520
    %1336 = vmatprep.subr.bf16.mxu0 0
    %1337 = vmatpush1.bf16.msra.mxu0 %v517
    %1338 = vmatprep.subr.bf16.mxu0 0
    %1339 = vmatpush1.bf16.msra.mxu0 %v514
    %1340 = vmatprep.subr.bf16.mxu0 0
    %1341 = vmatpush1.bf16.msra.mxu0 %v511
    %1342 = vmatprep.subr.bf16.mxu0 0
    %1343 = vmatpush2.bf16.msra.mxu0 0
    %1344 = vmatprep.subr.bf16.mxu0 0
    %1345 = vmatpush2.bf16.msra.mxu0 0
    %1346 = vmatprep.subr.bf16.mxu0 0
    %1347 = vmatpush2.bf16.msra.mxu0 0
    %1348 = vmatprep.subr.bf16.mxu0 0
    %1349 = vmatpush2.bf16.msra.mxu0 0
    %1350 = vmatprep.subr.bf16.mxu0 0
    %1351 = vmatpush2.bf16.msra.mxu0 0
    %1352 = vmatprep.subr.bf16.mxu0 0
    %1353 = vmatpush2.bf16.msra.mxu0 0
    %1354 = vmatprep.subr.bf16.mxu0 0
    %1355 = vmatpush2.bf16.msra.mxu0 0
    %1356 = vmatprep.subr.bf16.mxu0 0
    %1357 = vmatpush2.bf16.msra.mxu0 0
    %1358 = vmatprep.mubr.bf16.mxu0 0
    %1359 = vmatmul.mubr.bf16.gmra.mxu0 %v1284
    %v1360 = vpop.f32.mrf.mxu0
    %v1361 = vadd.f32 0.0, %v1360
    %v1362 = vpop.f32.mrf.mxu0
    %v1363 = vpop.f32.mrf.mxu0
    %v1364 = vpop.f32.mrf.mxu0
    %1365 = vdwg.mxu0
    %v1366 = vadd.f32 %v360, %v1320
    %v1367 = vxor.u32 %v1366, 2147483648
    %v1368 = vmul.f32 %v1367, 1.442695
    %v1369 = vpow.pop %v1368
    %v1370 = vadd.f32 %v1369, 1.0
    %v1371 = vrcp.pop %v1370
    %v1372 = vmul.f32 1.0, %v1371
    %v1373 = vadd.f32 %v362, %v1322
    %v1374 = vxor.u32 %v1373, 2147483648
    %v1375 = vmul.f32 %v1374, 1.442695
    %v1376 = vpow.pop %v1375
    %v1377 = vadd.f32 %v1376, 1.0
    %v1378 = vrcp.pop %v1377
    %v1379 = vmul.f32 1.0, %v1378
    %v1380 = vadd.f32 %v1361, %v133
    %v1381 = vmul.f32 %v1372, %v1380
    %v1382 = vadd.f32 %v426, %v1381
    %v1383 = vtanh.pop %v1382
    %v1384 = vsub.f32 1.0, %v1379
    %v1385 = vmul.f32 %v1384, %v1383
    %v1386 = vmul.f32 %v1379, %v1283
    %v1387 = vadd.f32 %v1385, %v1386
    %1388 = vst [vmem:[#allocation8] sm:$0xff] %v1387
    // Predicated region
    $region34: #{tpu_custom_call.1} parent=1 // pred_check
      _
    $region35: #{tpu_custom_call.1} parent=1 // pred_check_branch
      %1390 = sbr.rel (0) target = $region37
    $region36: #{tpu_custom_call.1} parent=1 // pred_region
      %s1392 = ssub.s32 128, 128
      %1393 = vsyncadd [#allocation4], %s1392
      %s1395 = sshll.u32 [#allocation8], 4
      %s1396 = int_to_ptr.vmem [resolvable:$true] %s1395
      %1398 = dma.vmem_to_hbm [thread:$0]  %s1396, 128, %s5, [#allocation4]
    $region37: #{tpu_custom_call.1} parent=1 // pred_fallthru
      _
    // Predicated region
    $region38: #{tpu_custom_call.1} parent=1 // pred_check
      _
    $region39: #{tpu_custom_call.1} parent=1 // pred_check_branch
      %1400 = sbr.rel (0) target = $region41
    $region40: #{tpu_custom_call.1} parent=1 // pred_region
      %1401 = dma.done [#allocation4], 128
    $region41: #{tpu_custom_call.1} parent=1 // pred_fallthru
      _
    %1402 = vsyncpa [#allocation3], 1
    %1403 = vsyncpa [#allocation6], 1
    %1404 = vsyncpa [#allocation4], 1

</llo_original>
